<compile_context>
chip_gen: v7x
topology: tpu7x:2x2x1
jax: 0.10.0
libtpu: 0.0.40
codegen_flags: <defaults>
</compile_context>

<pallas_src>
import functools

import jax
import jax.numpy as jnp
from jax.experimental import pallas as pl
from jax.experimental.pallas import tpu as pltpu


def _sepconv_kernel(x_ref, wc_ref, o_ref, *, K, dilation, Wp, M):
    # x_ref : (1, Cin, L)       flattened zero-padded image, row stride Wp
    # wc_ref: (K*K, Cout, Cin)  folded depthwise*pointwise weights
    # o_ref : (1, Cout, M)      M = Ho * Wp (columns Wo..Wp-1 are junk, cropped
    #                           by the caller with a free reshape + cheap slice)
    acc = jnp.zeros(o_ref.shape[1:], dtype=jnp.float32)          # (Cout, M) f32
    for kh in range(K):                                          # static unroll
        for kw in range(K):
            s = (kh * Wp + kw) * dilation                        # static offset
            tap = x_ref[0, :, s:s + M]                           # (Cin, M) lane-dense
            acc = acc + jnp.dot(wc_ref[kh * K + kw], tap,
                                preferred_element_type=jnp.float32)
    o_ref[0] = acc.astype(o_ref.dtype)


def separable_conv2d(x_nchw, dw_weight, pw_weight, *, stride=1, padding=0, dilation=1):
    """x_nchw: (N, Cin, H, W); dw_weight: (Cin, 1, K, K); pw_weight: (Cout, Cin, 1, 1)."""
    if stride != 1:
        # TODO(synk): strided depthwise conv not implemented in-kernel.
        raise NotImplementedError("separable_conv2d kernel only supports stride=1")

    N, Cin, H, W = x_nchw.shape
    K = dw_weight.shape[-1]
    Cout = pw_weight.shape[0]
    Ho = H + 2 * padding - dilation * (K - 1)
    Wo = W + 2 * padding - dilation * (K - 1)
    assert Ho >= 1 and Wo >= 1, "output spatial size must be positive"

    Wp = W + 2 * padding                       # padded width == flat row stride
    extra = 1 if (K - 1) * dilation > 0 else 0 # spare bottom row so every tap slice
                                               # stays in bounds (junk cols only)
    Hrows = H + 2 * padding + extra
    L = Hrows * Wp                             # flattened padded length per channel
    M = Ho * Wp                                # flattened output length per channel

    # Single pad (no layout transposes); the H*W flatten is a free reshape.
    xk = jnp.pad(x_nchw, ((0, 0), (0, 0),
                          (padding, padding + extra),
                          (padding, padding)))
    xk = xk.reshape(N, Cin, L)

    # Fold depthwise into pointwise on the host: wc[t, co, ci] = pw[co,ci]*dw[ci,t].
    dw = dw_weight.reshape(Cin, K * K)                       # (Cin, K*K)
    pw = pw_weight.reshape(Cout, Cin)                        # (Cout, Cin)
    wc = (pw[None, :, :] * dw.T[:, None, :]).astype(x_nchw.dtype)   # (K*K, Cout, Cin)

    kernel = functools.partial(_sepconv_kernel, K=K, dilation=dilation, Wp=Wp, M=M)

    itemsize = jnp.dtype(x_nchw.dtype).itemsize
    flops = 2 * N * (K * K) * Cout * Cin * M
    bytes_accessed = (xk.size * itemsize + wc.size * itemsize + N * Cout * M * itemsize)

    out_flat = pl.pallas_call(
        kernel,
        out_shape=jax.ShapeDtypeStruct((N, Cout, M), x_nchw.dtype),
        grid_spec=pltpu.PrefetchScalarGridSpec(
            num_scalar_prefetch=0,
            grid=(N,),
            in_specs=[
                pl.BlockSpec((1, Cin, L), lambda n: (n, 0, 0)),
                pl.BlockSpec((K * K, Cout, Cin), lambda n: (0, 0, 0)),
            ],
            out_specs=pl.BlockSpec((1, Cout, M), lambda n: (n, 0, 0)),
        ),
        compiler_params=pltpu.CompilerParams(dimension_semantics=("parallel",)),
        cost_estimate=pl.CostEstimate(flops=flops, transcendentals=0,
                                      bytes_accessed=bytes_accessed),
    )(xk, wc)

    # Free reshape + cheap column crop (drop the Wp-Wo junk columns) -> NCHW.
    return out_flat.reshape(N, Cout, Ho, Wp)[:, :, :, :Wo]


def _reference(x_nchw, dw_weight, pw_weight, *, padding, dilation):
    Cin = x_nchw.shape[1]
    dn = ("NCHW", "OIHW", "NCHW")
    y = jax.lax.conv_general_dilated(
        x_nchw, dw_weight, window_strides=(1, 1),
        padding=[(padding, padding), (padding, padding)],
        rhs_dilation=(dilation, dilation),
        dimension_numbers=dn, feature_group_count=Cin)
    y = jax.lax.conv_general_dilated(
        y, pw_weight, window_strides=(1, 1), padding="VALID",
        dimension_numbers=dn)
    return y


if __name__ == "__main__":
    # SeparableConv2d(in_channels=4, out_channels=8, kernel_size=3, padding=1, bias=False)
    N, Cin, H, W = 2, 4, 16, 16
    Cout, K, pad, dil = 8, 3, 1, 1

    key = jax.random.PRNGKey(0)
    kx, kdw, kpw = jax.random.split(key, 3)
    x = jax.random.normal(kx, (N, Cin, H, W), dtype=jnp.float32)
    dw_weight = jax.random.normal(kdw, (Cin, 1, K, K), dtype=jnp.float32) * 0.1
    pw_weight = jax.random.normal(kpw, (Cout, Cin, 1, 1), dtype=jnp.float32) * 0.1

    out = separable_conv2d(x, dw_weight, pw_weight, stride=1, padding=pad, dilation=dil)
    out = jax.block_until_ready(out)

    ref = _reference(x, dw_weight, pw_weight, padding=pad, dilation=dil)
    assert out.shape == ref.shape == (N, Cout, H, W)
    assert jnp.allclose(out, ref, atol=1e-4, rtol=1e-4)

    print("KERNEL_OK")
</pallas_src>

<mosaic_0001>
module attributes {stable_mosaic.version = 11 : i64} {
  func.func @_sepconv_kernel(%arg0: i32, %arg1: memref<1x4x342xf32, #tpu.memory_space<vmem>>, %arg2: memref<9x8x4xf32, #tpu.memory_space<vmem>>, %arg3: memref<1x8x288xf32, #tpu.memory_space<vmem>>) attributes {dimension_semantics = [#tpu.dimension_semantics<parallel>], iteration_bounds = array<i64: 2>, scalar_prefetch = 0 : i64, scratch_operands = 0 : i64, tpu.core_type = #tpu.core_type<tc>, window_params = [{transform_indices = @transform_0, window_bounds = array<i64: 1, 4, 342>}, {pipeline_mode = #tpu.pipeline_mode<synchronous>, transform_indices = @transform_1, window_bounds = array<i64: 9, 8, 4>}, {transform_indices = @transform_2, window_bounds = array<i64: 1, 8, 288>}]} {
    %cst = arith.constant 0.000000e+00 : f32
    %0 = vector.broadcast %cst : f32 to vector<8x288xf32>
    %c0 = arith.constant 0 : index
    %c0_0 = arith.constant 0 : index
    %c0_1 = arith.constant 0 : index
    %1 = vector.load %arg1[%c0, %c0_0, %c0_1] : memref<1x4x342xf32, #tpu.memory_space<vmem>>, vector<1x4x288xf32>
    %2 = vector.shape_cast %1 : vector<1x4x288xf32> to vector<4x288xf32>
    %c0_2 = arith.constant 0 : index
    %c0_3 = arith.constant 0 : index
    %c0_4 = arith.constant 0 : index
    %3 = vector.load %arg2[%c0_2, %c0_3, %c0_4] : memref<9x8x4xf32, #tpu.memory_space<vmem>>, vector<1x8x4xf32>
    %4 = vector.shape_cast %3 : vector<1x8x4xf32> to vector<8x4xf32>
    %cst_5 = arith.constant dense<0.000000e+00> : vector<8x288xf32>
    %5 = tpu.matmul %4, %2, %cst_5 {dimension_numbers = #tpu.dot_dimension_numbers<[1], [0], [0], [1], [0, 0, 1, 1], [], []>} : vector<8x4xf32>, vector<4x288xf32>, vector<8x288xf32> -> vector<8x288xf32>
    %6 = arith.addf %0, %5 : vector<8x288xf32>
    %c0_6 = arith.constant 0 : index
    %c0_7 = arith.constant 0 : index
    %c1 = arith.constant 1 : index
    %7 = vector.load %arg1[%c0_6, %c0_7, %c1] : memref<1x4x342xf32, #tpu.memory_space<vmem>>, vector<1x4x288xf32>
    %8 = vector.shape_cast %7 : vector<1x4x288xf32> to vector<4x288xf32>
    %c1_8 = arith.constant 1 : index
    %c0_9 = arith.constant 0 : index
    %c0_10 = arith.constant 0 : index
    %9 = vector.load %arg2[%c1_8, %c0_9, %c0_10] : memref<9x8x4xf32, #tpu.memory_space<vmem>>, vector<1x8x4xf32>
    %10 = vector.shape_cast %9 : vector<1x8x4xf32> to vector<8x4xf32>
    %cst_11 = arith.constant dense<0.000000e+00> : vector<8x288xf32>
    %11 = tpu.matmul %10, %8, %cst_11 {dimension_numbers = #tpu.dot_dimension_numbers<[1], [0], [0], [1], [0, 0, 1, 1], [], []>} : vector<8x4xf32>, vector<4x288xf32>, vector<8x288xf32> -> vector<8x288xf32>
    %12 = arith.addf %6, %11 : vector<8x288xf32>
    %c0_12 = arith.constant 0 : index
    %c0_13 = arith.constant 0 : index
    %c2 = arith.constant 2 : index
    %13 = vector.load %arg1[%c0_12, %c0_13, %c2] : memref<1x4x342xf32, #tpu.memory_space<vmem>>, vector<1x4x288xf32>
    %14 = vector.shape_cast %13 : vector<1x4x288xf32> to vector<4x288xf32>
    %c2_14 = arith.constant 2 : index
    %c0_15 = arith.constant 0 : index
    %c0_16 = arith.constant 0 : index
    %15 = vector.load %arg2[%c2_14, %c0_15, %c0_16] : memref<9x8x4xf32, #tpu.memory_space<vmem>>, vector<1x8x4xf32>
    %16 = vector.shape_cast %15 : vector<1x8x4xf32> to vector<8x4xf32>
    %cst_17 = arith.constant dense<0.000000e+00> : vector<8x288xf32>
    %17 = tpu.matmul %16, %14, %cst_17 {dimension_numbers = #tpu.dot_dimension_numbers<[1], [0], [0], [1], [0, 0, 1, 1], [], []>} : vector<8x4xf32>, vector<4x288xf32>, vector<8x288xf32> -> vector<8x288xf32>
    %18 = arith.addf %12, %17 : vector<8x288xf32>
    %c0_18 = arith.constant 0 : index
    %c0_19 = arith.constant 0 : index
    %c18 = arith.constant 18 : index
    %19 = vector.load %arg1[%c0_18, %c0_19, %c18] : memref<1x4x342xf32, #tpu.memory_space<vmem>>, vector<1x4x288xf32>
    %20 = vector.shape_cast %19 : vector<1x4x288xf32> to vector<4x288xf32>
    %c3 = arith.constant 3 : index
    %c0_20 = arith.constant 0 : index
    %c0_21 = arith.constant 0 : index
    %21 = vector.load %arg2[%c3, %c0_20, %c0_21] : memref<9x8x4xf32, #tpu.memory_space<vmem>>, vector<1x8x4xf32>
    %22 = vector.shape_cast %21 : vector<1x8x4xf32> to vector<8x4xf32>
    %cst_22 = arith.constant dense<0.000000e+00> : vector<8x288xf32>
    %23 = tpu.matmul %22, %20, %cst_22 {dimension_numbers = #tpu.dot_dimension_numbers<[1], [0], [0], [1], [0, 0, 1, 1], [], []>} : vector<8x4xf32>, vector<4x288xf32>, vector<8x288xf32> -> vector<8x288xf32>
    %24 = arith.addf %18, %23 : vector<8x288xf32>
    %c0_23 = arith.constant 0 : index
    %c0_24 = arith.constant 0 : index
    %c19 = arith.constant 19 : index
    %25 = vector.load %arg1[%c0_23, %c0_24, %c19] : memref<1x4x342xf32, #tpu.memory_space<vmem>>, vector<1x4x288xf32>
    %26 = vector.shape_cast %25 : vector<1x4x288xf32> to vector<4x288xf32>
    %c4 = arith.constant 4 : index
    %c0_25 = arith.constant 0 : index
    %c0_26 = arith.constant 0 : index
    %27 = vector.load %arg2[%c4, %c0_25, %c0_26] : memref<9x8x4xf32, #tpu.memory_space<vmem>>, vector<1x8x4xf32>
    %28 = vector.shape_cast %27 : vector<1x8x4xf32> to vector<8x4xf32>
    %cst_27 = arith.constant dense<0.000000e+00> : vector<8x288xf32>
    %29 = tpu.matmul %28, %26, %cst_27 {dimension_numbers = #tpu.dot_dimension_numbers<[1], [0], [0], [1], [0, 0, 1, 1], [], []>} : vector<8x4xf32>, vector<4x288xf32>, vector<8x288xf32> -> vector<8x288xf32>
    %30 = arith.addf %24, %29 : vector<8x288xf32>
    %c0_28 = arith.constant 0 : index
    %c0_29 = arith.constant 0 : index
    %c20 = arith.constant 20 : index
    %31 = vector.load %arg1[%c0_28, %c0_29, %c20] : memref<1x4x342xf32, #tpu.memory_space<vmem>>, vector<1x4x288xf32>
    %32 = vector.shape_cast %31 : vector<1x4x288xf32> to vector<4x288xf32>
    %c5 = arith.constant 5 : index
    %c0_30 = arith.constant 0 : index
    %c0_31 = arith.constant 0 : index
    %33 = vector.load %arg2[%c5, %c0_30, %c0_31] : memref<9x8x4xf32, #tpu.memory_space<vmem>>, vector<1x8x4xf32>
    %34 = vector.shape_cast %33 : vector<1x8x4xf32> to vector<8x4xf32>
    %cst_32 = arith.constant dense<0.000000e+00> : vector<8x288xf32>
    %35 = tpu.matmul %34, %32, %cst_32 {dimension_numbers = #tpu.dot_dimension_numbers<[1], [0], [0], [1], [0, 0, 1, 1], [], []>} : vector<8x4xf32>, vector<4x288xf32>, vector<8x288xf32> -> vector<8x288xf32>
    %36 = arith.addf %30, %35 : vector<8x288xf32>
    %c0_33 = arith.constant 0 : index
    %c0_34 = arith.constant 0 : index
    %c36 = arith.constant 36 : index
    %37 = vector.load %arg1[%c0_33, %c0_34, %c36] : memref<1x4x342xf32, #tpu.memory_space<vmem>>, vector<1x4x288xf32>
    %38 = vector.shape_cast %37 : vector<1x4x288xf32> to vector<4x288xf32>
    %c6 = arith.constant 6 : index
    %c0_35 = arith.constant 0 : index
    %c0_36 = arith.constant 0 : index
    %39 = vector.load %arg2[%c6, %c0_35, %c0_36] : memref<9x8x4xf32, #tpu.memory_space<vmem>>, vector<1x8x4xf32>
    %40 = vector.shape_cast %39 : vector<1x8x4xf32> to vector<8x4xf32>
    %cst_37 = arith.constant dense<0.000000e+00> : vector<8x288xf32>
    %41 = tpu.matmul %40, %38, %cst_37 {dimension_numbers = #tpu.dot_dimension_numbers<[1], [0], [0], [1], [0, 0, 1, 1], [], []>} : vector<8x4xf32>, vector<4x288xf32>, vector<8x288xf32> -> vector<8x288xf32>
    %42 = arith.addf %36, %41 : vector<8x288xf32>
    %c0_38 = arith.constant 0 : index
    %c0_39 = arith.constant 0 : index
    %c37 = arith.constant 37 : index
    %43 = vector.load %arg1[%c0_38, %c0_39, %c37] : memref<1x4x342xf32, #tpu.memory_space<vmem>>, vector<1x4x288xf32>
    %44 = vector.shape_cast %43 : vector<1x4x288xf32> to vector<4x288xf32>
    %c7 = arith.constant 7 : index
    %c0_40 = arith.constant 0 : index
    %c0_41 = arith.constant 0 : index
    %45 = vector.load %arg2[%c7, %c0_40, %c0_41] : memref<9x8x4xf32, #tpu.memory_space<vmem>>, vector<1x8x4xf32>
    %46 = vector.shape_cast %45 : vector<1x8x4xf32> to vector<8x4xf32>
    %cst_42 = arith.constant dense<0.000000e+00> : vector<8x288xf32>
    %47 = tpu.matmul %46, %44, %cst_42 {dimension_numbers = #tpu.dot_dimension_numbers<[1], [0], [0], [1], [0, 0, 1, 1], [], []>} : vector<8x4xf32>, vector<4x288xf32>, vector<8x288xf32> -> vector<8x288xf32>
    %48 = arith.addf %42, %47 : vector<8x288xf32>
    %c0_43 = arith.constant 0 : index
    %c0_44 = arith.constant 0 : index
    %c38 = arith.constant 38 : index
    %49 = vector.load %arg1[%c0_43, %c0_44, %c38] : memref<1x4x342xf32, #tpu.memory_space<vmem>>, vector<1x4x288xf32>
    %50 = vector.shape_cast %49 : vector<1x4x288xf32> to vector<4x288xf32>
    %c8 = arith.constant 8 : index
    %c0_45 = arith.constant 0 : index
    %c0_46 = arith.constant 0 : index
    %51 = vector.load %arg2[%c8, %c0_45, %c0_46] : memref<9x8x4xf32, #tpu.memory_space<vmem>>, vector<1x8x4xf32>
    %52 = vector.shape_cast %51 : vector<1x8x4xf32> to vector<8x4xf32>
    %cst_47 = arith.constant dense<0.000000e+00> : vector<8x288xf32>
    %53 = tpu.matmul %52, %50, %cst_47 {dimension_numbers = #tpu.dot_dimension_numbers<[1], [0], [0], [1], [0, 0, 1, 1], [], []>} : vector<8x4xf32>, vector<4x288xf32>, vector<8x288xf32> -> vector<8x288xf32>
    %54 = arith.addf %48, %53 : vector<8x288xf32>
    %c0_48 = arith.constant 0 : index
    %c0_49 = arith.constant 0 : index
    %c0_50 = arith.constant 0 : index
    %55 = vector.load %arg3[%c0_48, %c0_49, %c0_50] : memref<1x8x288xf32, #tpu.memory_space<vmem>>, vector<1x8x288xf32>
    %56 = vector.shape_cast %55 : vector<1x8x288xf32> to vector<8x288xf32>
    %57 = vector.shape_cast %54 : vector<8x288xf32> to vector<1x8x288xf32>
    tpu.vector_store %arg3[%c0_48, %c0_49, %c0_50], %57 {strides = array<i32>} : memref<1x8x288xf32, #tpu.memory_space<vmem>>, vector<1x8x288xf32>,
    return
  }
  func.func @transform_0(%arg0: i32) -> (i32, i32, i32) {
    %c0_i32 = arith.constant 0 : i32
    %c0_i32_0 = arith.constant 0 : i32
    %c0_i32_1 = arith.constant 0 : i32
    return %arg0, %c0_i32, %c0_i32_0 : i32, i32, i32
  }
  func.func @transform_1(%arg0: i32) -> (i32, i32, i32) {
    %c0_i32 = arith.constant 0 : i32
    %c0_i32_0 = arith.constant 0 : i32
    %c0_i32_1 = arith.constant 0 : i32
    %c0_i32_2 = arith.constant 0 : i32
    return %c0_i32, %c0_i32_0, %c0_i32_1 : i32, i32, i32
  }
  func.func @transform_2(%arg0: i32) -> (i32, i32, i32) {
    %c0_i32 = arith.constant 0 : i32
    %c0_i32_0 = arith.constant 0 : i32
    %c0_i32_1 = arith.constant 0 : i32
    return %arg0, %c0_i32, %c0_i32_0 : i32, i32, i32
  }
}

</mosaic_0001>

<llo_original>
// kernel: tpu_custom_call.1
$region0: #{tpu_custom_call.1}
  #allocation0 [shape = 'u32[]', space=smem, size = 0x4, offset = 0x4, fixed_abs, tag = 'smem constant byte address 0x4 - core index']
  #allocation1 [shape = 'u32[144,128]{1,0:T(1,128)}', space=vmem, size = 0x12000, scoped, tag = 'internal scratch']
  %s0 = inlined_call_operand.vmem [shape: f32[2,4,342], index: 0, kind: input, shape index: {}]
  %s1 = inlined_call_operand.vmem [shape: f32[9,8,4], index: 1, kind: input, shape index: {}]
  %s2 = inlined_call_operand.hbm [shape: f32[2,8,288], index: 2, kind: output, shape index: {}]
  %s3 = sld [smem:[#allocation0]]
  $region41: #{tpu_custom_call.1} parent=0
    _
  %s5 = ssub.s32 1, %s3
  %s6 = scalar_select 0, %s5, %s3
  $region1: #{tpu_custom_call.1} parent=0
    #allocation2 [shape = 'u8[24576]{0}', space=vmem, size = 0x6000, scoped, tag = 'output window, operand 0']
    #allocation3 [shape = 's32[2]{0}', space=sflag, size = 0x8, scoped, tag = 'scoped memory for tpu_custom_call.1']
    %7 = vsyncpa [#allocation3], 0
    %s8 = scalar_lea.sflag [#allocation3], 1
    %9 = vsyncpa %s8, 0
    loop: start=0, step=1, limit=4
    $region2: #{tpu_custom_call.1} parent=1 // loop_pre_header
      _
    $region3: #{tpu_custom_call.1} parent=1 // loop_header
      %s11 = sphi 0, %s15
      %p12 = scmp.ge.s32.totalorder %s11, 4
      %s21 = sphi 0, %s23
      %s24 = sphi 0, %s21
      %s25 = sphi 0, %s24
      %s41 = sphi 0, %s25
      %s45 = sphi 0, %s45
      %s47 = sphi 0, %s45
      %s48 = sphi 0, %s47
      %s62 = sphi 0, %s48
      %s68 = sphi 0, %s70
      %s71 = sphi 0, %s68
      %s72 = sphi 0, %s71
      %s88 = sphi 0, %s72
    $region4: #{tpu_custom_call.1} parent=1 // loop_header_branch
      %14 = sbr.rel (%p12) target = $region8
    $region5: #{tpu_custom_call.1} parent=1 // loop_body
      %s16 = ssub.s32 %s11, 1
      %s17 = ssub.s32 %s11, 2
      %s18 = sadd.s32 %s11, 1
      %s19 = ssub.s32 %s11, %s18
      %p20 = scmp.eq.s32.totalorder %s19, 0
      %s22 = sadd.s32 %s21, 1
      %s23 = scalar_select %p20, %s21, %s22
      %p26 = pneg %p20
      %p27 = scmp.eq.s32.totalorder %s11, 1
      %p28 = por %p26, %p27
      %p29 = scmp.ne.s32.totalorder %s21, %s24
      %p30 = scmp.eq.s32.totalorder %s11, 0
      %p31 = por %p29, %p30
      %p32 = scmp.ne.s32.totalorder %s21, %s24
      %p33 = scmp.eq.s32.totalorder %s16, 1
      %p34 = por %p32, %p33
      %p35 = scmp.ne.s32.totalorder %s24, %s25
      %p36 = scmp.eq.s32.totalorder %s16, 0
      %p37 = por %p35, %p36
      %p38 = scmp.ne.s32.totalorder %s24, %s25
      %p39 = scmp.eq.s32.totalorder %s17, 1
      %p40 = por %p38, %p39
      %p42 = scmp.ne.s32.totalorder %s25, %s41
      %p43 = scmp.eq.s32.totalorder %s17, 0
      %p44 = por %p42, %p43
      %s46 = sadd.s32 %s45, 1
      %p49 = scmp.eq.s32.totalorder %s11, 1
      %p50 = scmp.ne.s32.totalorder %s45, %s47
      %p51 = scmp.eq.s32.totalorder %s11, 0
      %p52 = por %p50, %p51
      %p53 = scmp.ne.s32.totalorder %s45, %s47
      %p54 = scmp.eq.s32.totalorder %s16, 1
      %p55 = por %p53, %p54
      %p56 = scmp.ne.s32.totalorder %s47, %s48
      %p57 = scmp.eq.s32.totalorder %s16, 0
      %p58 = por %p56, %p57
      %p59 = scmp.ne.s32.totalorder %s47, %s48
      %p60 = scmp.eq.s32.totalorder %s17, 1
      %p61 = por %p59, %p60
      %p63 = scmp.ne.s32.totalorder %s48, %s62
      %p64 = scmp.eq.s32.totalorder %s17, 0
      %p65 = por %p63, %p64
      %s66 = ssub.s32 %s11, %s18
      %p67 = scmp.eq.s32.totalorder %s66, 0
      %s69 = sadd.s32 %s68, 1
      %s70 = scalar_select %p67, %s68, %s69
      %p73 = pneg %p67
      %p74 = scmp.eq.s32.totalorder %s11, 1
      %p75 = por %p73, %p74
      %p76 = scmp.ne.s32.totalorder %s68, %s71
      %p77 = scmp.eq.s32.totalorder %s11, 0
      %p78 = por %p76, %p77
      %p79 = scmp.ne.s32.totalorder %s68, %s71
      %p80 = scmp.eq.s32.totalorder %s16, 1
      %p81 = por %p79, %p80
      %p82 = scmp.ne.s32.totalorder %s71, %s72
      %p83 = scmp.eq.s32.totalorder %s16, 0
      %p84 = por %p82, %p83
      %p85 = scmp.ne.s32.totalorder %s71, %s72
      %p86 = scmp.eq.s32.totalorder %s17, 1
      %p87 = por %p85, %p86
      %p89 = scmp.ne.s32.totalorder %s72, %s88
      %p90 = scmp.eq.s32.totalorder %s17, 0
      %p91 = por %p89, %p90
      %p92 = scmp.le.s32.totalorder 1, %s11
      %p93 = scmp.lt.s32.totalorder %s11, 3
      %p94 = pnand %p92, %p93
      %p95 = pneg %p94
      // Predicated region
      $region9: #{tpu_custom_call.1} parent=5 // pred_check
        _
      $region10: #{tpu_custom_call.1} parent=5 // pred_check_branch
        %97 = sbr.rel (%p94) target = $region12
      $region11: #{tpu_custom_call.1} parent=5 // pred_region
        %s98 = ssub.s32 %s11, 1
        // Predicated region
        $region13: #{tpu_custom_call.1} parent=11 // pred_check
          %p99 = pneg %p58
        $region14: #{tpu_custom_call.1} parent=11 // pred_check_branch
          %101 = sbr.rel (%p99) target = $region16
        $region15: #{tpu_custom_call.1} parent=11 // pred_region
          _
        $region16: #{tpu_custom_call.1} parent=11 // pred_fallthru
          _
      $region12: #{tpu_custom_call.1} parent=5 // pred_fallthru
        _
      %p102 = scmp.lt.s32.totalorder %s11, 2
      // Predicated region
      $region17: #{tpu_custom_call.1} parent=5 // pred_check
        %p103 = pneg %p102
      $region18: #{tpu_custom_call.1} parent=5 // pred_check_branch
        %105 = sbr.rel (%p103) target = $region20
      $region19: #{tpu_custom_call.1} parent=5 // pred_region
        // Predicated region
        $region21: #{tpu_custom_call.1} parent=19 // pred_check
          %p106 = pneg %p31
        $region22: #{tpu_custom_call.1} parent=19 // pred_check_branch
          %108 = sbr.rel (%p106) target = $region24
        $region23: #{tpu_custom_call.1} parent=19 // pred_region
          %p109 = scmp.lt.s32.totalorder %s11, 1
          %s110 = scalar_select %p109, %s11, 1
          %s111 = smul.addr %s110, 3
          %s112 = smul.addr %s111, 4
          %s113 = scalar_lea.vmem %s0, %s112
        $region24: #{tpu_custom_call.1} parent=19 // pred_fallthru
          _
      $region20: #{tpu_custom_call.1} parent=5 // pred_fallthru
        _
      %p114 = scmp.le.s32.totalorder 1, %s11
      %p115 = scmp.lt.s32.totalorder %s11, 3
      %p116 = pnand %p114, %p115
      %p117 = pneg %p116
      // Predicated region
      $region25: #{tpu_custom_call.1} parent=5 // pred_check
        _
      $region26: #{tpu_custom_call.1} parent=5 // pred_check_branch
        %119 = sbr.rel (%p116) target = $region28
      $region27: #{tpu_custom_call.1} parent=5 // pred_region
        %s120 = ssub.s32 %s11, 1
        %p121 = scmp.lt.s32.totalorder %s16, 1
        %s122 = scalar_select %p121, %s16, 1
        %s123 = smul.addr %s122, 3
        %s124 = smul.addr %s123, 4
        %s125 = scalar_lea.vmem %s0, %s124
        %p126 = pneg %p37
        %p127 = pneg %p34
        %p128 = pneg %p58
        %p129 = pneg %p55
        %p130 = pneg %p84
        %p131 = pneg %p81
        %s132 = sand.u32 %s71, 1
        %s133 = scalar_lea.sflag [#allocation3], %s132
        %s134 = sand.u32 %s71, 1
        %s135 = smul.addr %s134, 24
        %s136 = scalar_lea.vmem [#allocation2], %s135
        %p137 = scmp.lt.s32.totalorder %s16, 1
        %s138 = scalar_select %p137, %s16, 1
        %s139 = smul.addr %s138, 3
        %s140 = smul.addr %s139, 4
        %s141 = scalar_lea.vmem %s0, %s140
        %v142 = vld [vmem:[%s141] sm:$0xff]
        %v143 = vld [vmem:[%s141 + $0x8] sm:$0xf]
        %v144 = vld [vmem:[%s1] sm:$0xff]
        %s145 = scalar_lea.vmem %s1, 8
        %v146 = vld [vmem:[%s145] sm:$0xff]
        %v149 = vcombine.high %v142, %v142
        %150 = vrot.lane.b32.xlu0 %v142, 127
        %v151 = vpop.permute.xlu0 %150
        %152 = vrot.lane.b32.xlu0 %v149, 127
        %v153 = vpop.permute.xlu0 %152
        %154 = vrot.lane.b32.xlu0 %v143, 127
        %v155 = vpop.permute.xlu0 %154
        %vm156 = vcmask 1039360
        %v157 = vsel %vm156, %v151, %v153
        %v158 = vsel %vm156, %v153, %v155
        %vm159 = vcmask 31744
        %v161 = vsel %vm159, %v146, 0
        %vm163 = vcmask 1043456
        %v164 = vsel %vm163, %v157, 0
        %v166 = vsel %vm163, %v158, 0
        %v168 = vsel %vm163, %v155, 0
        %170 = vmatprep.subr.mxu0 %v166
        %171 = vmatpush1.msra.mxu0 %v164
        %172 = vmatprep.subr.mxu0 0.0
        %173 = vmatpush1.msra.mxu0 0.0
        %174 = vmatprep.subr.mxu0 0.0
        %175 = vmatpush1.msra.mxu0 0.0
        %176 = vmatprep.subr.mxu0 0.0
        %177 = vmatpush1.msra.mxu0 0.0
        %178 = vmatprep.subr.mxu0 0.0
        %179 = vmatpush1.msra.mxu0 0.0
        %180 = vmatprep.subr.mxu0 0.0
        %181 = vmatpush1.msra.mxu0 0.0
        %182 = vmatprep.subr.mxu0 0.0
        %183 = vmatpush1.msra.mxu0 0.0
        %184 = vmatprep.subr.mxu0 0.0
        %185 = vmatpush1.msra.mxu0 0.0
        %186 = vmatprep.subr.mxu0 0.0
        %187 = vmatpush1.msra.mxu0 0.0
        %188 = vmatprep.subr.mxu0 0.0
        %189 = vmatpush1.msra.mxu0 0.0
        %190 = vmatprep.subr.mxu0 0.0
        %191 = vmatpush1.msra.mxu0 0.0
        %192 = vmatprep.subr.mxu0 0.0
        %193 = vmatpush1.msra.mxu0 0.0
        %194 = vmatprep.subr.mxu0 0.0
        %195 = vmatpush1.msra.mxu0 0.0
        %196 = vmatprep.subr.mxu0 0.0
        %197 = vmatpush1.msra.mxu0 0.0
        %198 = vmatprep.subr.mxu0 0.0
        %199 = vmatpush1.msra.mxu0 0.0
        %200 = vmatprep.subr.mxu0 0.0
        %201 = vmatpush1.msra.mxu0 0.0
        %202 = vmatprep.subr.mxu0 0.0
        %203 = vmatpush1.msra.mxu0 0.0
        %204 = vmatprep.subr.mxu0 0.0
        %205 = vmatpush1.msra.mxu0 0.0
        %206 = vmatprep.subr.mxu0 0.0
        %207 = vmatpush1.msra.mxu0 0.0
        %208 = vmatprep.subr.mxu0 0.0
        %209 = vmatpush1.msra.mxu0 0.0
        %210 = vmatprep.subr.mxu0 0.0
        %211 = vmatpush1.msra.mxu0 0.0
        %212 = vmatprep.subr.mxu0 0.0
        %213 = vmatpush1.msra.mxu0 0.0
        %214 = vmatprep.subr.mxu0 0.0
        %215 = vmatpush1.msra.mxu0 0.0
        %216 = vmatprep.subr.mxu0 0.0
        %217 = vmatpush1.msra.mxu0 0.0
        %218 = vmatprep.subr.mxu0 0.0
        %219 = vmatpush1.msra.mxu0 0.0
        %220 = vmatprep.subr.mxu0 0.0
        %221 = vmatpush1.msra.mxu0 0.0
        %222 = vmatprep.subr.mxu0 0.0
        %223 = vmatpush1.msra.mxu0 0.0
        %224 = vmatprep.subr.mxu0 0.0
        %225 = vmatpush1.msra.mxu0 0.0
        %226 = vmatprep.subr.mxu0 0.0
        %227 = vmatpush1.msra.mxu0 0.0
        %228 = vmatprep.subr.mxu0 0.0
        %229 = vmatpush1.msra.mxu0 0.0
        %230 = vmatprep.subr.mxu0 0.0
        %231 = vmatpush1.msra.mxu0 0.0
        %232 = vmatprep.subr.mxu0 0.0
        %233 = vmatpush1.msra.mxu0 0.0
        %234 = vmatprep.mubr.f32.mxu0 0.0
        %235 = vmatmul.mubr.f32.gmra.mrb[0].mxu0 %v161
        %v236 = vpop.f32.mrb[0].mxu0
        %v237 = vadd.f32 0.0, %v236
        %v238 = vpop.f32.mrb[0].mxu0
        %v239 = vadd.f32 0.0, %v238
        %240 = vdwg.mxu0
        %241 = vmatprep.subr.mxu0 0.0
        %242 = vmatpush1.msra.mxu0 %v168
        %243 = vmatprep.subr.mxu0 0.0
        %244 = vmatpush1.msra.mxu0 0.0
        %245 = vmatprep.subr.mxu0 0.0
        %246 = vmatpush1.msra.mxu0 0.0
        %247 = vmatprep.subr.mxu0 0.0
        %248 = vmatpush1.msra.mxu0 0.0
        %249 = vmatprep.subr.mxu0 0.0
        %250 = vmatpush1.msra.mxu0 0.0
        %251 = vmatprep.subr.mxu0 0.0
        %252 = vmatpush1.msra.mxu0 0.0
        %253 = vmatprep.subr.mxu0 0.0
        %254 = vmatpush1.msra.mxu0 0.0
        %255 = vmatprep.subr.mxu0 0.0
        %256 = vmatpush1.msra.mxu0 0.0
        %257 = vmatprep.subr.mxu0 0.0
        %258 = vmatpush1.msra.mxu0 0.0
        %259 = vmatprep.subr.mxu0 0.0
        %260 = vmatpush1.msra.mxu0 0.0
        %261 = vmatprep.subr.mxu0 0.0
        %262 = vmatpush1.msra.mxu0 0.0
        %263 = vmatprep.subr.mxu0 0.0
        %264 = vmatpush1.msra.mxu0 0.0
        %265 = vmatprep.subr.mxu0 0.0
        %266 = vmatpush1.msra.mxu0 0.0
        %267 = vmatprep.subr.mxu0 0.0
        %268 = vmatpush1.msra.mxu0 0.0
        %269 = vmatprep.subr.mxu0 0.0
        %270 = vmatpush1.msra.mxu0 0.0
        %271 = vmatprep.subr.mxu0 0.0
        %272 = vmatpush1.msra.mxu0 0.0
        %273 = vmatprep.subr.mxu0 0.0
        %274 = vmatpush1.msra.mxu0 0.0
        %275 = vmatprep.subr.mxu0 0.0
        %276 = vmatpush1.msra.mxu0 0.0
        %277 = vmatprep.subr.mxu0 0.0
        %278 = vmatpush1.msra.mxu0 0.0
        %279 = vmatprep.subr.mxu0 0.0
        %280 = vmatpush1.msra.mxu0 0.0
        %281 = vmatprep.subr.mxu0 0.0
        %282 = vmatpush1.msra.mxu0 0.0
        %283 = vmatprep.subr.mxu0 0.0
        %284 = vmatpush1.msra.mxu0 0.0
        %285 = vmatprep.subr.mxu0 0.0
        %286 = vmatpush1.msra.mxu0 0.0
        %287 = vmatprep.subr.mxu0 0.0
        %288 = vmatpush1.msra.mxu0 0.0
        %289 = vmatprep.subr.mxu0 0.0
        %290 = vmatpush1.msra.mxu0 0.0
        %291 = vmatprep.subr.mxu0 0.0
        %292 = vmatpush1.msra.mxu0 0.0
        %293 = vmatprep.subr.mxu0 0.0
        %294 = vmatpush1.msra.mxu0 0.0
        %295 = vmatprep.subr.mxu0 0.0
        %296 = vmatpush1.msra.mxu0 0.0
        %297 = vmatprep.subr.mxu0 0.0
        %298 = vmatpush1.msra.mxu0 0.0
        %299 = vmatprep.subr.mxu0 0.0
        %300 = vmatpush1.msra.mxu0 0.0
        %301 = vmatprep.subr.mxu0 0.0
        %302 = vmatpush1.msra.mxu0 0.0
        %303 = vmatprep.subr.mxu0 0.0
        %304 = vmatpush1.msra.mxu0 0.0
        %305 = vmatprep.mubr.f32.mxu0 0.0
        %306 = vmatmul.mubr.f32.gmra.mrb[0].mxu0 %v161
        %v307 = vpop.f32.mrb[0].mxu0
        %v308 = vadd.f32 0.0, %v307
        %v309 = vpop.f32.mrb[0].mxu0
        %310 = vdwg.mxu0
        %v312 = vsel %vm159, %v144, 0
        %v314 = vsel %vm163, %v142, 0
        %v316 = vsel %vm163, %v149, 0
        %v318 = vsel %vm163, %v143, 0
        %320 = vmatprep.subr.mxu0 %v316
        %321 = vmatpush1.msra.mxu0 %v314
        %322 = vmatprep.subr.mxu0 0.0
        %323 = vmatpush1.msra.mxu0 0.0
        %324 = vmatprep.subr.mxu0 0.0
        %325 = vmatpush1.msra.mxu0 0.0
        %326 = vmatprep.subr.mxu0 0.0
        %327 = vmatpush1.msra.mxu0 0.0
        %328 = vmatprep.subr.mxu0 0.0
        %329 = vmatpush1.msra.mxu0 0.0
        %330 = vmatprep.subr.mxu0 0.0
        %331 = vmatpush1.msra.mxu0 0.0
        %332 = vmatprep.subr.mxu0 0.0
        %333 = vmatpush1.msra.mxu0 0.0
        %334 = vmatprep.subr.mxu0 0.0
        %335 = vmatpush1.msra.mxu0 0.0
        %336 = vmatprep.subr.mxu0 0.0
        %337 = vmatpush1.msra.mxu0 0.0
        %338 = vmatprep.subr.mxu0 0.0
        %339 = vmatpush1.msra.mxu0 0.0
        %340 = vmatprep.subr.mxu0 0.0
        %341 = vmatpush1.msra.mxu0 0.0
        %342 = vmatprep.subr.mxu0 0.0
        %343 = vmatpush1.msra.mxu0 0.0
        %344 = vmatprep.subr.mxu0 0.0
        %345 = vmatpush1.msra.mxu0 0.0
        %346 = vmatprep.subr.mxu0 0.0
        %347 = vmatpush1.msra.mxu0 0.0
        %348 = vmatprep.subr.mxu0 0.0
        %349 = vmatpush1.msra.mxu0 0.0
        %350 = vmatprep.subr.mxu0 0.0
        %351 = vmatpush1.msra.mxu0 0.0
        %352 = vmatprep.subr.mxu0 0.0
        %353 = vmatpush1.msra.mxu0 0.0
        %354 = vmatprep.subr.mxu0 0.0
        %355 = vmatpush1.msra.mxu0 0.0
        %356 = vmatprep.subr.mxu0 0.0
        %357 = vmatpush1.msra.mxu0 0.0
        %358 = vmatprep.subr.mxu0 0.0
        %359 = vmatpush1.msra.mxu0 0.0
        %360 = vmatprep.subr.mxu0 0.0
        %361 = vmatpush1.msra.mxu0 0.0
        %362 = vmatprep.subr.mxu0 0.0
        %363 = vmatpush1.msra.mxu0 0.0
        %364 = vmatprep.subr.mxu0 0.0
        %365 = vmatpush1.msra.mxu0 0.0
        %366 = vmatprep.subr.mxu0 0.0
        %367 = vmatpush1.msra.mxu0 0.0
        %368 = vmatprep.subr.mxu0 0.0
        %369 = vmatpush1.msra.mxu0 0.0
        %370 = vmatprep.subr.mxu0 0.0
        %371 = vmatpush1.msra.mxu0 0.0
        %372 = vmatprep.subr.mxu0 0.0
        %373 = vmatpush1.msra.mxu0 0.0
        %374 = vmatprep.subr.mxu0 0.0
        %375 = vmatpush1.msra.mxu0 0.0
        %376 = vmatprep.subr.mxu0 0.0
        %377 = vmatpush1.msra.mxu0 0.0
        %378 = vmatprep.subr.mxu0 0.0
        %379 = vmatpush1.msra.mxu0 0.0
        %380 = vmatprep.subr.mxu0 0.0
        %381 = vmatpush1.msra.mxu0 0.0
        %382 = vmatprep.subr.mxu0 0.0
        %383 = vmatpush1.msra.mxu0 0.0
        %384 = vmatprep.mubr.f32.mxu0 0.0
        %385 = vmatmul.mubr.f32.gmra.mrb[0].mxu0 %v312
        %v386 = vpop.f32.mrb[0].mxu0
        %v387 = vadd.f32 %v237, %v386
        %v388 = vpop.f32.mrb[0].mxu0
        %v389 = vadd.f32 %v239, %v388
        %390 = vdwg.mxu0
        %391 = vmatprep.subr.mxu0 0.0
        %392 = vmatpush1.msra.mxu0 %v318
        %393 = vmatprep.subr.mxu0 0.0
        %394 = vmatpush1.msra.mxu0 0.0
        %395 = vmatprep.subr.mxu0 0.0
        %396 = vmatpush1.msra.mxu0 0.0
        %397 = vmatprep.subr.mxu0 0.0
        %398 = vmatpush1.msra.mxu0 0.0
        %399 = vmatprep.subr.mxu0 0.0
        %400 = vmatpush1.msra.mxu0 0.0
        %401 = vmatprep.subr.mxu0 0.0
        %402 = vmatpush1.msra.mxu0 0.0
        %403 = vmatprep.subr.mxu0 0.0
        %404 = vmatpush1.msra.mxu0 0.0
        %405 = vmatprep.subr.mxu0 0.0
        %406 = vmatpush1.msra.mxu0 0.0
        %407 = vmatprep.subr.mxu0 0.0
        %408 = vmatpush1.msra.mxu0 0.0
        %409 = vmatprep.subr.mxu0 0.0
        %410 = vmatpush1.msra.mxu0 0.0
        %411 = vmatprep.subr.mxu0 0.0
        %412 = vmatpush1.msra.mxu0 0.0
        %413 = vmatprep.subr.mxu0 0.0
        %414 = vmatpush1.msra.mxu0 0.0
        %415 = vmatprep.subr.mxu0 0.0
        %416 = vmatpush1.msra.mxu0 0.0
        %417 = vmatprep.subr.mxu0 0.0
        %418 = vmatpush1.msra.mxu0 0.0
        %419 = vmatprep.subr.mxu0 0.0
        %420 = vmatpush1.msra.mxu0 0.0
        %421 = vmatprep.subr.mxu0 0.0
        %422 = vmatpush1.msra.mxu0 0.0
        %423 = vmatprep.subr.mxu0 0.0
        %424 = vmatpush1.msra.mxu0 0.0
        %425 = vmatprep.subr.mxu0 0.0
        %426 = vmatpush1.msra.mxu0 0.0
        %427 = vmatprep.subr.mxu0 0.0
        %428 = vmatpush1.msra.mxu0 0.0
        %429 = vmatprep.subr.mxu0 0.0
        %430 = vmatpush1.msra.mxu0 0.0
        %431 = vmatprep.subr.mxu0 0.0
        %432 = vmatpush1.msra.mxu0 0.0
        %433 = vmatprep.subr.mxu0 0.0
        %434 = vmatpush1.msra.mxu0 0.0
        %435 = vmatprep.subr.mxu0 0.0
        %436 = vmatpush1.msra.mxu0 0.0
        %437 = vmatprep.subr.mxu0 0.0
        %438 = vmatpush1.msra.mxu0 0.0
        %439 = vmatprep.subr.mxu0 0.0
        %440 = vmatpush1.msra.mxu0 0.0
        %441 = vmatprep.subr.mxu0 0.0
        %442 = vmatpush1.msra.mxu0 0.0
        %443 = vmatprep.subr.mxu0 0.0
        %444 = vmatpush1.msra.mxu0 0.0
        %445 = vmatprep.subr.mxu0 0.0
        %446 = vmatpush1.msra.mxu0 0.0
        %447 = vmatprep.subr.mxu0 0.0
        %448 = vmatpush1.msra.mxu0 0.0
        %449 = vmatprep.subr.mxu0 0.0
        %450 = vmatpush1.msra.mxu0 0.0
        %451 = vmatprep.subr.mxu0 0.0
        %452 = vmatpush1.msra.mxu0 0.0
        %453 = vmatprep.subr.mxu0 0.0
        %454 = vmatpush1.msra.mxu0 0.0
        %455 = vmatprep.mubr.f32.mxu0 0.0
        %456 = vmatmul.mubr.f32.gmra.mrb[0].mxu0 %v312
        %v457 = vpop.f32.mrb[0].mxu0
        %v458 = vadd.f32 %v308, %v457
        %v459 = vpop.f32.mrb[0].mxu0
        %460 = vdwg.mxu0
        %v461 = vld [vmem:[%s141] sm:$0xff]
        %v462 = vld [vmem:[%s141 + $0x8] sm:$0xf]
        %s463 = scalar_lea.vmem %s1, 16
        %v464 = vld [vmem:[%s463] sm:$0xff]
        %v467 = vcombine.high %v461, %v461
        %468 = vrot.lane.b32.xlu0 %v461, 126
        %v469 = vpop.permute.xlu0 %468
        %470 = vrot.lane.b32.xlu0 %v467, 126
        %v471 = vpop.permute.xlu0 %470
        %472 = vrot.lane.b32.xlu0 %v462, 126
        %v473 = vpop.permute.xlu0 %472
        %vm474 = vcmask 1031168
        %v475 = vsel %vm474, %v469, %v471
        %v476 = vsel %vm474, %v471, %v473
        %v478 = vsel %vm159, %v464, 0
        %v480 = vsel %vm163, %v475, 0
        %v482 = vsel %vm163, %v476, 0
        %v484 = vsel %vm163, %v473, 0
        %486 = vmatprep.subr.mxu0 %v482
        %487 = vmatpush1.msra.mxu0 %v480
        %488 = vmatprep.subr.mxu0 0.0
        %489 = vmatpush1.msra.mxu0 0.0
        %490 = vmatprep.subr.mxu0 0.0
        %491 = vmatpush1.msra.mxu0 0.0
        %492 = vmatprep.subr.mxu0 0.0
        %493 = vmatpush1.msra.mxu0 0.0
        %494 = vmatprep.subr.mxu0 0.0
        %495 = vmatpush1.msra.mxu0 0.0
        %496 = vmatprep.subr.mxu0 0.0
        %497 = vmatpush1.msra.mxu0 0.0
        %498 = vmatprep.subr.mxu0 0.0
        %499 = vmatpush1.msra.mxu0 0.0
        %500 = vmatprep.subr.mxu0 0.0
        %501 = vmatpush1.msra.mxu0 0.0
        %502 = vmatprep.subr.mxu0 0.0
        %503 = vmatpush1.msra.mxu0 0.0
        %504 = vmatprep.subr.mxu0 0.0
        %505 = vmatpush1.msra.mxu0 0.0
        %506 = vmatprep.subr.mxu0 0.0
        %507 = vmatpush1.msra.mxu0 0.0
        %508 = vmatprep.subr.mxu0 0.0
        %509 = vmatpush1.msra.mxu0 0.0
        %510 = vmatprep.subr.mxu0 0.0
        %511 = vmatpush1.msra.mxu0 0.0
        %512 = vmatprep.subr.mxu0 0.0
        %513 = vmatpush1.msra.mxu0 0.0
        %514 = vmatprep.subr.mxu0 0.0
        %515 = vmatpush1.msra.mxu0 0.0
        %516 = vmatprep.subr.mxu0 0.0
        %517 = vmatpush1.msra.mxu0 0.0
        %518 = vmatprep.subr.mxu0 0.0
        %519 = vmatpush1.msra.mxu0 0.0
        %520 = vmatprep.subr.mxu0 0.0
        %521 = vmatpush1.msra.mxu0 0.0
        %522 = vmatprep.subr.mxu0 0.0
        %523 = vmatpush1.msra.mxu0 0.0
        %524 = vmatprep.subr.mxu0 0.0
        %525 = vmatpush1.msra.mxu0 0.0
        %526 = vmatprep.subr.mxu0 0.0
        %527 = vmatpush1.msra.mxu0 0.0
        %528 = vmatprep.subr.mxu0 0.0
        %529 = vmatpush1.msra.mxu0 0.0
        %530 = vmatprep.subr.mxu0 0.0
        %531 = vmatpush1.msra.mxu0 0.0
        %532 = vmatprep.subr.mxu0 0.0
        %533 = vmatpush1.msra.mxu0 0.0
        %534 = vmatprep.subr.mxu0 0.0
        %535 = vmatpush1.msra.mxu0 0.0
        %536 = vmatprep.subr.mxu0 0.0
        %537 = vmatpush1.msra.mxu0 0.0
        %538 = vmatprep.subr.mxu0 0.0
        %539 = vmatpush1.msra.mxu0 0.0
        %540 = vmatprep.subr.mxu0 0.0
        %541 = vmatpush1.msra.mxu0 0.0
        %542 = vmatprep.subr.mxu0 0.0
        %543 = vmatpush1.msra.mxu0 0.0
        %544 = vmatprep.subr.mxu0 0.0
        %545 = vmatpush1.msra.mxu0 0.0
        %546 = vmatprep.subr.mxu0 0.0
        %547 = vmatpush1.msra.mxu0 0.0
        %548 = vmatprep.subr.mxu0 0.0
        %549 = vmatpush1.msra.mxu0 0.0
        %550 = vmatprep.mubr.f32.mxu0 0.0
        %551 = vmatmul.mubr.f32.gmra.mrb[0].mxu0 %v478
        %v552 = vpop.f32.mrb[0].mxu0
        %v553 = vadd.f32 0.0, %v552
        %v554 = vpop.f32.mrb[0].mxu0
        %v555 = vadd.f32 0.0, %v554
        %556 = vdwg.mxu0
        %557 = vmatprep.subr.mxu0 0.0
        %558 = vmatpush1.msra.mxu0 %v484
        %559 = vmatprep.subr.mxu0 0.0
        %560 = vmatpush1.msra.mxu0 0.0
        %561 = vmatprep.subr.mxu0 0.0
        %562 = vmatpush1.msra.mxu0 0.0
        %563 = vmatprep.subr.mxu0 0.0
        %564 = vmatpush1.msra.mxu0 0.0
        %565 = vmatprep.subr.mxu0 0.0
        %566 = vmatpush1.msra.mxu0 0.0
        %567 = vmatprep.subr.mxu0 0.0
        %568 = vmatpush1.msra.mxu0 0.0
        %569 = vmatprep.subr.mxu0 0.0
        %570 = vmatpush1.msra.mxu0 0.0
        %571 = vmatprep.subr.mxu0 0.0
        %572 = vmatpush1.msra.mxu0 0.0
        %573 = vmatprep.subr.mxu0 0.0
        %574 = vmatpush1.msra.mxu0 0.0
        %575 = vmatprep.subr.mxu0 0.0
        %576 = vmatpush1.msra.mxu0 0.0
        %577 = vmatprep.subr.mxu0 0.0
        %578 = vmatpush1.msra.mxu0 0.0
        %579 = vmatprep.subr.mxu0 0.0
        %580 = vmatpush1.msra.mxu0 0.0
        %581 = vmatprep.subr.mxu0 0.0
        %582 = vmatpush1.msra.mxu0 0.0
        %583 = vmatprep.subr.mxu0 0.0
        %584 = vmatpush1.msra.mxu0 0.0
        %585 = vmatprep.subr.mxu0 0.0
        %586 = vmatpush1.msra.mxu0 0.0
        %587 = vmatprep.subr.mxu0 0.0
        %588 = vmatpush1.msra.mxu0 0.0
        %589 = vmatprep.subr.mxu0 0.0
        %590 = vmatpush1.msra.mxu0 0.0
        %591 = vmatprep.subr.mxu0 0.0
        %592 = vmatpush1.msra.mxu0 0.0
        %593 = vmatprep.subr.mxu0 0.0
        %594 = vmatpush1.msra.mxu0 0.0
        %595 = vmatprep.subr.mxu0 0.0
        %596 = vmatpush1.msra.mxu0 0.0
        %597 = vmatprep.subr.mxu0 0.0
        %598 = vmatpush1.msra.mxu0 0.0
        %599 = vmatprep.subr.mxu0 0.0
        %600 = vmatpush1.msra.mxu0 0.0
        %601 = vmatprep.subr.mxu0 0.0
        %602 = vmatpush1.msra.mxu0 0.0
        %603 = vmatprep.subr.mxu0 0.0
        %604 = vmatpush1.msra.mxu0 0.0
        %605 = vmatprep.subr.mxu0 0.0
        %606 = vmatpush1.msra.mxu0 0.0
        %607 = vmatprep.subr.mxu0 0.0
        %608 = vmatpush1.msra.mxu0 0.0
        %609 = vmatprep.subr.mxu0 0.0
        %610 = vmatpush1.msra.mxu0 0.0
        %611 = vmatprep.subr.mxu0 0.0
        %612 = vmatpush1.msra.mxu0 0.0
        %613 = vmatprep.subr.mxu0 0.0
        %614 = vmatpush1.msra.mxu0 0.0
        %615 = vmatprep.subr.mxu0 0.0
        %616 = vmatpush1.msra.mxu0 0.0
        %617 = vmatprep.subr.mxu0 0.0
        %618 = vmatpush1.msra.mxu0 0.0
        %619 = vmatprep.subr.mxu0 0.0
        %620 = vmatpush1.msra.mxu0 0.0
        %621 = vmatprep.mubr.f32.mxu0 0.0
        %622 = vmatmul.mubr.f32.gmra.mrb[0].mxu0 %v478
        %v623 = vpop.f32.mrb[0].mxu0
        %v624 = vadd.f32 0.0, %v623
        %v625 = vpop.f32.mrb[0].mxu0
        %626 = vdwg.mxu0
        %v627 = vadd.f32 %v387, %v553
        %v628 = vadd.f32 %v389, %v555
        %v629 = vadd.f32 %v458, %v624
        %v630 = vld [vmem:[%s141] sm:$0xff]
        %v631 = vld [vmem:[%s141 + $0x8] sm:$0xf]
        %s632 = scalar_lea.vmem %s1, 24
        %v633 = vld [vmem:[%s632] sm:$0xff]
        %v636 = vcombine.high %v630, %v630
        %637 = vrot.lane.b32.xlu0 %v630, 110
        %v638 = vpop.permute.xlu0 %637
        %639 = vrot.lane.b32.xlu0 %v636, 110
        %v640 = vpop.permute.xlu0 %639
        %641 = vrot.lane.b32.xlu0 %v631, 110
        %v642 = vpop.permute.xlu0 %641
        %vm643 = vcmask 900096
        %v644 = vsel %vm643, %v638, %v640
        %v645 = vsel %vm643, %v640, %v642
        %v647 = vsel %vm159, %v633, 0
        %v649 = vsel %vm163, %v644, 0
        %v651 = vsel %vm163, %v645, 0
        %v653 = vsel %vm163, %v642, 0
        %655 = vmatprep.subr.mxu0 %v651
        %656 = vmatpush1.msra.mxu0 %v649
        %657 = vmatprep.subr.mxu0 0.0
        %658 = vmatpush1.msra.mxu0 0.0
        %659 = vmatprep.subr.mxu0 0.0
        %660 = vmatpush1.msra.mxu0 0.0
        %661 = vmatprep.subr.mxu0 0.0
        %662 = vmatpush1.msra.mxu0 0.0
        %663 = vmatprep.subr.mxu0 0.0
        %664 = vmatpush1.msra.mxu0 0.0
        %665 = vmatprep.subr.mxu0 0.0
        %666 = vmatpush1.msra.mxu0 0.0
        %667 = vmatprep.subr.mxu0 0.0
        %668 = vmatpush1.msra.mxu0 0.0
        %669 = vmatprep.subr.mxu0 0.0
        %670 = vmatpush1.msra.mxu0 0.0
        %671 = vmatprep.subr.mxu0 0.0
        %672 = vmatpush1.msra.mxu0 0.0
        %673 = vmatprep.subr.mxu0 0.0
        %674 = vmatpush1.msra.mxu0 0.0
        %675 = vmatprep.subr.mxu0 0.0
        %676 = vmatpush1.msra.mxu0 0.0
        %677 = vmatprep.subr.mxu0 0.0
        %678 = vmatpush1.msra.mxu0 0.0
        %679 = vmatprep.subr.mxu0 0.0
        %680 = vmatpush1.msra.mxu0 0.0
        %681 = vmatprep.subr.mxu0 0.0
        %682 = vmatpush1.msra.mxu0 0.0
        %683 = vmatprep.subr.mxu0 0.0
        %684 = vmatpush1.msra.mxu0 0.0
        %685 = vmatprep.subr.mxu0 0.0
        %686 = vmatpush1.msra.mxu0 0.0
        %687 = vmatprep.subr.mxu0 0.0
        %688 = vmatpush1.msra.mxu0 0.0
        %689 = vmatprep.subr.mxu0 0.0
        %690 = vmatpush1.msra.mxu0 0.0
        %691 = vmatprep.subr.mxu0 0.0
        %692 = vmatpush1.msra.mxu0 0.0
        %693 = vmatprep.subr.mxu0 0.0
        %694 = vmatpush1.msra.mxu0 0.0
        %695 = vmatprep.subr.mxu0 0.0
        %696 = vmatpush1.msra.mxu0 0.0
        %697 = vmatprep.subr.mxu0 0.0
        %698 = vmatpush1.msra.mxu0 0.0
        %699 = vmatprep.subr.mxu0 0.0
        %700 = vmatpush1.msra.mxu0 0.0
        %701 = vmatprep.subr.mxu0 0.0
        %702 = vmatpush1.msra.mxu0 0.0
        %703 = vmatprep.subr.mxu0 0.0
        %704 = vmatpush1.msra.mxu0 0.0
        %705 = vmatprep.subr.mxu0 0.0
        %706 = vmatpush1.msra.mxu0 0.0
        %707 = vmatprep.subr.mxu0 0.0
        %708 = vmatpush1.msra.mxu0 0.0
        %709 = vmatprep.subr.mxu0 0.0
        %710 = vmatpush1.msra.mxu0 0.0
        %711 = vmatprep.subr.mxu0 0.0
        %712 = vmatpush1.msra.mxu0 0.0
        %713 = vmatprep.subr.mxu0 0.0
        %714 = vmatpush1.msra.mxu0 0.0
        %715 = vmatprep.subr.mxu0 0.0
        %716 = vmatpush1.msra.mxu0 0.0
        %717 = vmatprep.subr.mxu0 0.0
        %718 = vmatpush1.msra.mxu0 0.0
        %719 = vmatprep.mubr.f32.mxu0 0.0
        %720 = vmatmul.mubr.f32.gmra.mrb[0].mxu0 %v647
        %v721 = vpop.f32.mrb[0].mxu0
        %v722 = vadd.f32 0.0, %v721
        %v723 = vpop.f32.mrb[0].mxu0
        %v724 = vadd.f32 0.0, %v723
        %725 = vdwg.mxu0
        %726 = vmatprep.subr.mxu0 0.0
        %727 = vmatpush1.msra.mxu0 %v653
        %728 = vmatprep.subr.mxu0 0.0
        %729 = vmatpush1.msra.mxu0 0.0
        %730 = vmatprep.subr.mxu0 0.0
        %731 = vmatpush1.msra.mxu0 0.0
        %732 = vmatprep.subr.mxu0 0.0
        %733 = vmatpush1.msra.mxu0 0.0
        %734 = vmatprep.subr.mxu0 0.0
        %735 = vmatpush1.msra.mxu0 0.0
        %736 = vmatprep.subr.mxu0 0.0
        %737 = vmatpush1.msra.mxu0 0.0
        %738 = vmatprep.subr.mxu0 0.0
        %739 = vmatpush1.msra.mxu0 0.0
        %740 = vmatprep.subr.mxu0 0.0
        %741 = vmatpush1.msra.mxu0 0.0
        %742 = vmatprep.subr.mxu0 0.0
        %743 = vmatpush1.msra.mxu0 0.0
        %744 = vmatprep.subr.mxu0 0.0
        %745 = vmatpush1.msra.mxu0 0.0
        %746 = vmatprep.subr.mxu0 0.0
        %747 = vmatpush1.msra.mxu0 0.0
        %748 = vmatprep.subr.mxu0 0.0
        %749 = vmatpush1.msra.mxu0 0.0
        %750 = vmatprep.subr.mxu0 0.0
        %751 = vmatpush1.msra.mxu0 0.0
        %752 = vmatprep.subr.mxu0 0.0
        %753 = vmatpush1.msra.mxu0 0.0
        %754 = vmatprep.subr.mxu0 0.0
        %755 = vmatpush1.msra.mxu0 0.0
        %756 = vmatprep.subr.mxu0 0.0
        %757 = vmatpush1.msra.mxu0 0.0
        %758 = vmatprep.subr.mxu0 0.0
        %759 = vmatpush1.msra.mxu0 0.0
        %760 = vmatprep.subr.mxu0 0.0
        %761 = vmatpush1.msra.mxu0 0.0
        %762 = vmatprep.subr.mxu0 0.0
        %763 = vmatpush1.msra.mxu0 0.0
        %764 = vmatprep.subr.mxu0 0.0
        %765 = vmatpush1.msra.mxu0 0.0
        %766 = vmatprep.subr.mxu0 0.0
        %767 = vmatpush1.msra.mxu0 0.0
        %768 = vmatprep.subr.mxu0 0.0
        %769 = vmatpush1.msra.mxu0 0.0
        %770 = vmatprep.subr.mxu0 0.0
        %771 = vmatpush1.msra.mxu0 0.0
        %772 = vmatprep.subr.mxu0 0.0
        %773 = vmatpush1.msra.mxu0 0.0
        %774 = vmatprep.subr.mxu0 0.0
        %775 = vmatpush1.msra.mxu0 0.0
        %776 = vmatprep.subr.mxu0 0.0
        %777 = vmatpush1.msra.mxu0 0.0
        %778 = vmatprep.subr.mxu0 0.0
        %779 = vmatpush1.msra.mxu0 0.0
        %780 = vmatprep.subr.mxu0 0.0
        %781 = vmatpush1.msra.mxu0 0.0
        %782 = vmatprep.subr.mxu0 0.0
        %783 = vmatpush1.msra.mxu0 0.0
        %784 = vmatprep.subr.mxu0 0.0
        %785 = vmatpush1.msra.mxu0 0.0
        %786 = vmatprep.subr.mxu0 0.0
        %787 = vmatpush1.msra.mxu0 0.0
        %788 = vmatprep.subr.mxu0 0.0
        %789 = vmatpush1.msra.mxu0 0.0
        %790 = vmatprep.mubr.f32.mxu0 0.0
        %791 = vmatmul.mubr.f32.gmra.mrb[0].mxu0 %v647
        %v792 = vpop.f32.mrb[0].mxu0
        %v793 = vadd.f32 0.0, %v792
        %v794 = vpop.f32.mrb[0].mxu0
        %795 = vdwg.mxu0
        %v796 = vadd.f32 %v627, %v722
        %v797 = vadd.f32 %v628, %v724
        %v798 = vadd.f32 %v629, %v793
        %v799 = vld [vmem:[%s141] sm:$0xff]
        %v800 = vld [vmem:[%s141 + $0x8] sm:$0xf]
        %s801 = scalar_lea.vmem %s1, 32
        %v802 = vld [vmem:[%s801] sm:$0xff]
        %v805 = vcombine.high %v799, %v799
        %806 = vrot.lane.b32.xlu0 %v799, 109
        %v807 = vpop.permute.xlu0 %806
        %808 = vrot.lane.b32.xlu0 %v805, 109
        %v809 = vpop.permute.xlu0 %808
        %810 = vrot.lane.b32.xlu0 %v800, 109
        %v811 = vpop.permute.xlu0 %810
        %vm812 = vcmask 891904
        %v813 = vsel %vm812, %v807, %v809
        %v814 = vsel %vm812, %v809, %v811
        %v816 = vsel %vm159, %v802, 0
        %v818 = vsel %vm163, %v813, 0
        %v820 = vsel %vm163, %v814, 0
        %v822 = vsel %vm163, %v811, 0
        %824 = vmatprep.subr.mxu0 %v820
        %825 = vmatpush1.msra.mxu0 %v818
        %826 = vmatprep.subr.mxu0 0.0
        %827 = vmatpush1.msra.mxu0 0.0
        %828 = vmatprep.subr.mxu0 0.0
        %829 = vmatpush1.msra.mxu0 0.0
        %830 = vmatprep.subr.mxu0 0.0
        %831 = vmatpush1.msra.mxu0 0.0
        %832 = vmatprep.subr.mxu0 0.0
        %833 = vmatpush1.msra.mxu0 0.0
        %834 = vmatprep.subr.mxu0 0.0
        %835 = vmatpush1.msra.mxu0 0.0
        %836 = vmatprep.subr.mxu0 0.0
        %837 = vmatpush1.msra.mxu0 0.0
        %838 = vmatprep.subr.mxu0 0.0
        %839 = vmatpush1.msra.mxu0 0.0
        %840 = vmatprep.subr.mxu0 0.0
        %841 = vmatpush1.msra.mxu0 0.0
        %842 = vmatprep.subr.mxu0 0.0
        %843 = vmatpush1.msra.mxu0 0.0
        %844 = vmatprep.subr.mxu0 0.0
        %845 = vmatpush1.msra.mxu0 0.0
        %846 = vmatprep.subr.mxu0 0.0
        %847 = vmatpush1.msra.mxu0 0.0
        %848 = vmatprep.subr.mxu0 0.0
        %849 = vmatpush1.msra.mxu0 0.0
        %850 = vmatprep.subr.mxu0 0.0
        %851 = vmatpush1.msra.mxu0 0.0
        %852 = vmatprep.subr.mxu0 0.0
        %853 = vmatpush1.msra.mxu0 0.0
        %854 = vmatprep.subr.mxu0 0.0
        %855 = vmatpush1.msra.mxu0 0.0
        %856 = vmatprep.subr.mxu0 0.0
        %857 = vmatpush1.msra.mxu0 0.0
        %858 = vmatprep.subr.mxu0 0.0
        %859 = vmatpush1.msra.mxu0 0.0
        %860 = vmatprep.subr.mxu0 0.0
        %861 = vmatpush1.msra.mxu0 0.0
        %862 = vmatprep.subr.mxu0 0.0
        %863 = vmatpush1.msra.mxu0 0.0
        %864 = vmatprep.subr.mxu0 0.0
        %865 = vmatpush1.msra.mxu0 0.0
        %866 = vmatprep.subr.mxu0 0.0
        %867 = vmatpush1.msra.mxu0 0.0
        %868 = vmatprep.subr.mxu0 0.0
        %869 = vmatpush1.msra.mxu0 0.0
        %870 = vmatprep.subr.mxu0 0.0
        %871 = vmatpush1.msra.mxu0 0.0
        %872 = vmatprep.subr.mxu0 0.0
        %873 = vmatpush1.msra.mxu0 0.0
        %874 = vmatprep.subr.mxu0 0.0
        %875 = vmatpush1.msra.mxu0 0.0
        %876 = vmatprep.subr.mxu0 0.0
        %877 = vmatpush1.msra.mxu0 0.0
        %878 = vmatprep.subr.mxu0 0.0
        %879 = vmatpush1.msra.mxu0 0.0
        %880 = vmatprep.subr.mxu0 0.0
        %881 = vmatpush1.msra.mxu0 0.0
        %882 = vmatprep.subr.mxu0 0.0
        %883 = vmatpush1.msra.mxu0 0.0
        %884 = vmatprep.subr.mxu0 0.0
        %885 = vmatpush1.msra.mxu0 0.0
        %886 = vmatprep.subr.mxu0 0.0
        %887 = vmatpush1.msra.mxu0 0.0
        %888 = vmatprep.mubr.f32.mxu0 0.0
        %889 = vmatmul.mubr.f32.gmra.mrb[0].mxu0 %v816
        %v890 = vpop.f32.mrb[0].mxu0
        %v891 = vadd.f32 0.0, %v890
        %v892 = vpop.f32.mrb[0].mxu0
        %v893 = vadd.f32 0.0, %v892
        %894 = vdwg.mxu0
        %895 = vmatprep.subr.mxu0 0.0
        %896 = vmatpush1.msra.mxu0 %v822
        %897 = vmatprep.subr.mxu0 0.0
        %898 = vmatpush1.msra.mxu0 0.0
        %899 = vmatprep.subr.mxu0 0.0
        %900 = vmatpush1.msra.mxu0 0.0
        %901 = vmatprep.subr.mxu0 0.0
        %902 = vmatpush1.msra.mxu0 0.0
        %903 = vmatprep.subr.mxu0 0.0
        %904 = vmatpush1.msra.mxu0 0.0
        %905 = vmatprep.subr.mxu0 0.0
        %906 = vmatpush1.msra.mxu0 0.0
        %907 = vmatprep.subr.mxu0 0.0
        %908 = vmatpush1.msra.mxu0 0.0
        %909 = vmatprep.subr.mxu0 0.0
        %910 = vmatpush1.msra.mxu0 0.0
        %911 = vmatprep.subr.mxu0 0.0
        %912 = vmatpush1.msra.mxu0 0.0
        %913 = vmatprep.subr.mxu0 0.0
        %914 = vmatpush1.msra.mxu0 0.0
        %915 = vmatprep.subr.mxu0 0.0
        %916 = vmatpush1.msra.mxu0 0.0
        %917 = vmatprep.subr.mxu0 0.0
        %918 = vmatpush1.msra.mxu0 0.0
        %919 = vmatprep.subr.mxu0 0.0
        %920 = vmatpush1.msra.mxu0 0.0
        %921 = vmatprep.subr.mxu0 0.0
        %922 = vmatpush1.msra.mxu0 0.0
        %923 = vmatprep.subr.mxu0 0.0
        %924 = vmatpush1.msra.mxu0 0.0
        %925 = vmatprep.subr.mxu0 0.0
        %926 = vmatpush1.msra.mxu0 0.0
        %927 = vmatprep.subr.mxu0 0.0
        %928 = vmatpush1.msra.mxu0 0.0
        %929 = vmatprep.subr.mxu0 0.0
        %930 = vmatpush1.msra.mxu0 0.0
        %931 = vmatprep.subr.mxu0 0.0
        %932 = vmatpush1.msra.mxu0 0.0
        %933 = vmatprep.subr.mxu0 0.0
        %934 = vmatpush1.msra.mxu0 0.0
        %935 = vmatprep.subr.mxu0 0.0
        %936 = vmatpush1.msra.mxu0 0.0
        %937 = vmatprep.subr.mxu0 0.0
        %938 = vmatpush1.msra.mxu0 0.0
        %939 = vmatprep.subr.mxu0 0.0
        %940 = vmatpush1.msra.mxu0 0.0
        %941 = vmatprep.subr.mxu0 0.0
        %942 = vmatpush1.msra.mxu0 0.0
        %943 = vmatprep.subr.mxu0 0.0
        %944 = vmatpush1.msra.mxu0 0.0
        %945 = vmatprep.subr.mxu0 0.0
        %946 = vmatpush1.msra.mxu0 0.0
        %947 = vmatprep.subr.mxu0 0.0
        %948 = vmatpush1.msra.mxu0 0.0
        %949 = vmatprep.subr.mxu0 0.0
        %950 = vmatpush1.msra.mxu0 0.0
        %951 = vmatprep.subr.mxu0 0.0
        %952 = vmatpush1.msra.mxu0 0.0
        %953 = vmatprep.subr.mxu0 0.0
        %954 = vmatpush1.msra.mxu0 0.0
        %955 = vmatprep.subr.mxu0 0.0
        %956 = vmatpush1.msra.mxu0 0.0
        %957 = vmatprep.subr.mxu0 0.0
        %958 = vmatpush1.msra.mxu0 0.0
        %959 = vmatprep.mubr.f32.mxu0 0.0
        %960 = vmatmul.mubr.f32.gmra.mrb[0].mxu0 %v816
        %v961 = vpop.f32.mrb[0].mxu0
        %v962 = vadd.f32 0.0, %v961
        %v963 = vpop.f32.mrb[0].mxu0
        %964 = vdwg.mxu0
        %v965 = vadd.f32 %v796, %v891
        %v966 = vadd.f32 %v797, %v893
        %v967 = vadd.f32 %v798, %v962
        %v968 = vld [vmem:[%s141] sm:$0xff]
        %v969 = vld [vmem:[%s141 + $0x8] sm:$0xf]
        %s970 = scalar_lea.vmem %s1, 40
        %v971 = vld [vmem:[%s970] sm:$0xff]
        %v974 = vcombine.high %v968, %v968
        %975 = vrot.lane.b32.xlu0 %v968, 108
        %v976 = vpop.permute.xlu0 %975
        %977 = vrot.lane.b32.xlu0 %v974, 108
        %v978 = vpop.permute.xlu0 %977
        %979 = vrot.lane.b32.xlu0 %v969, 108
        %v980 = vpop.permute.xlu0 %979
        %vm981 = vcmask 883712
        %v982 = vsel %vm981, %v976, %v978
        %v983 = vsel %vm981, %v978, %v980
        %v985 = vsel %vm159, %v971, 0
        %v987 = vsel %vm163, %v982, 0
        %v989 = vsel %vm163, %v983, 0
        %v991 = vsel %vm163, %v980, 0
        %993 = vmatprep.subr.mxu0 %v989
        %994 = vmatpush1.msra.mxu0 %v987
        %995 = vmatprep.subr.mxu0 0.0
        %996 = vmatpush1.msra.mxu0 0.0
        %997 = vmatprep.subr.mxu0 0.0
        %998 = vmatpush1.msra.mxu0 0.0
        %999 = vmatprep.subr.mxu0 0.0
        %1000 = vmatpush1.msra.mxu0 0.0
        %1001 = vmatprep.subr.mxu0 0.0
        %1002 = vmatpush1.msra.mxu0 0.0
        %1003 = vmatprep.subr.mxu0 0.0
        %1004 = vmatpush1.msra.mxu0 0.0
        %1005 = vmatprep.subr.mxu0 0.0
        %1006 = vmatpush1.msra.mxu0 0.0
        %1007 = vmatprep.subr.mxu0 0.0
        %1008 = vmatpush1.msra.mxu0 0.0
        %1009 = vmatprep.subr.mxu0 0.0
        %1010 = vmatpush1.msra.mxu0 0.0
        %1011 = vmatprep.subr.mxu0 0.0
        %1012 = vmatpush1.msra.mxu0 0.0
        %1013 = vmatprep.subr.mxu0 0.0
        %1014 = vmatpush1.msra.mxu0 0.0
        %1015 = vmatprep.subr.mxu0 0.0
        %1016 = vmatpush1.msra.mxu0 0.0
        %1017 = vmatprep.subr.mxu0 0.0
        %1018 = vmatpush1.msra.mxu0 0.0
        %1019 = vmatprep.subr.mxu0 0.0
        %1020 = vmatpush1.msra.mxu0 0.0
        %1021 = vmatprep.subr.mxu0 0.0
        %1022 = vmatpush1.msra.mxu0 0.0
        %1023 = vmatprep.subr.mxu0 0.0
        %1024 = vmatpush1.msra.mxu0 0.0
        %1025 = vmatprep.subr.mxu0 0.0
        %1026 = vmatpush1.msra.mxu0 0.0
        %1027 = vmatprep.subr.mxu0 0.0
        %1028 = vmatpush1.msra.mxu0 0.0
        %1029 = vmatprep.subr.mxu0 0.0
        %1030 = vmatpush1.msra.mxu0 0.0
        %1031 = vmatprep.subr.mxu0 0.0
        %1032 = vmatpush1.msra.mxu0 0.0
        %1033 = vmatprep.subr.mxu0 0.0
        %1034 = vmatpush1.msra.mxu0 0.0
        %1035 = vmatprep.subr.mxu0 0.0
        %1036 = vmatpush1.msra.mxu0 0.0
        %1037 = vmatprep.subr.mxu0 0.0
        %1038 = vmatpush1.msra.mxu0 0.0
        %1039 = vmatprep.subr.mxu0 0.0
        %1040 = vmatpush1.msra.mxu0 0.0
        %1041 = vmatprep.subr.mxu0 0.0
        %1042 = vmatpush1.msra.mxu0 0.0
        %1043 = vmatprep.subr.mxu0 0.0
        %1044 = vmatpush1.msra.mxu0 0.0
        %1045 = vmatprep.subr.mxu0 0.0
        %1046 = vmatpush1.msra.mxu0 0.0
        %1047 = vmatprep.subr.mxu0 0.0
        %1048 = vmatpush1.msra.mxu0 0.0
        %1049 = vmatprep.subr.mxu0 0.0
        %1050 = vmatpush1.msra.mxu0 0.0
        %1051 = vmatprep.subr.mxu0 0.0
        %1052 = vmatpush1.msra.mxu0 0.0
        %1053 = vmatprep.subr.mxu0 0.0
        %1054 = vmatpush1.msra.mxu0 0.0
        %1055 = vmatprep.subr.mxu0 0.0
        %1056 = vmatpush1.msra.mxu0 0.0
        %1057 = vmatprep.mubr.f32.mxu0 0.0
        %1058 = vmatmul.mubr.f32.gmra.mrb[0].mxu0 %v985
        %v1059 = vpop.f32.mrb[0].mxu0
        %v1060 = vadd.f32 0.0, %v1059
        %v1061 = vpop.f32.mrb[0].mxu0
        %v1062 = vadd.f32 0.0, %v1061
        %1063 = vdwg.mxu0
        %1064 = vmatprep.subr.mxu0 0.0
        %1065 = vmatpush1.msra.mxu0 %v991
        %1066 = vmatprep.subr.mxu0 0.0
        %1067 = vmatpush1.msra.mxu0 0.0
        %1068 = vmatprep.subr.mxu0 0.0
        %1069 = vmatpush1.msra.mxu0 0.0
        %1070 = vmatprep.subr.mxu0 0.0
        %1071 = vmatpush1.msra.mxu0 0.0
        %1072 = vmatprep.subr.mxu0 0.0
        %1073 = vmatpush1.msra.mxu0 0.0
        %1074 = vmatprep.subr.mxu0 0.0
        %1075 = vmatpush1.msra.mxu0 0.0
        %1076 = vmatprep.subr.mxu0 0.0
        %1077 = vmatpush1.msra.mxu0 0.0
        %1078 = vmatprep.subr.mxu0 0.0
        %1079 = vmatpush1.msra.mxu0 0.0
        %1080 = vmatprep.subr.mxu0 0.0
        %1081 = vmatpush1.msra.mxu0 0.0
        %1082 = vmatprep.subr.mxu0 0.0
        %1083 = vmatpush1.msra.mxu0 0.0
        %1084 = vmatprep.subr.mxu0 0.0
        %1085 = vmatpush1.msra.mxu0 0.0
        %1086 = vmatprep.subr.mxu0 0.0
        %1087 = vmatpush1.msra.mxu0 0.0
        %1088 = vmatprep.subr.mxu0 0.0
        %1089 = vmatpush1.msra.mxu0 0.0
        %1090 = vmatprep.subr.mxu0 0.0
        %1091 = vmatpush1.msra.mxu0 0.0
        %1092 = vmatprep.subr.mxu0 0.0
        %1093 = vmatpush1.msra.mxu0 0.0
        %1094 = vmatprep.subr.mxu0 0.0
        %1095 = vmatpush1.msra.mxu0 0.0
        %1096 = vmatprep.subr.mxu0 0.0
        %1097 = vmatpush1.msra.mxu0 0.0
        %1098 = vmatprep.subr.mxu0 0.0
        %1099 = vmatpush1.msra.mxu0 0.0
        %1100 = vmatprep.subr.mxu0 0.0
        %1101 = vmatpush1.msra.mxu0 0.0
        %1102 = vmatprep.subr.mxu0 0.0
        %1103 = vmatpush1.msra.mxu0 0.0
        %1104 = vmatprep.subr.mxu0 0.0
        %1105 = vmatpush1.msra.mxu0 0.0
        %1106 = vmatprep.subr.mxu0 0.0
        %1107 = vmatpush1.msra.mxu0 0.0
        %1108 = vmatprep.subr.mxu0 0.0
        %1109 = vmatpush1.msra.mxu0 0.0
        %1110 = vmatprep.subr.mxu0 0.0
        %1111 = vmatpush1.msra.mxu0 0.0
        %1112 = vmatprep.subr.mxu0 0.0
        %1113 = vmatpush1.msra.mxu0 0.0
        %1114 = vmatprep.subr.mxu0 0.0
        %1115 = vmatpush1.msra.mxu0 0.0
        %1116 = vmatprep.subr.mxu0 0.0
        %1117 = vmatpush1.msra.mxu0 0.0
        %1118 = vmatprep.subr.mxu0 0.0
        %1119 = vmatpush1.msra.mxu0 0.0
        %1120 = vmatprep.subr.mxu0 0.0
        %1121 = vmatpush1.msra.mxu0 0.0
        %1122 = vmatprep.subr.mxu0 0.0
        %1123 = vmatpush1.msra.mxu0 0.0
        %1124 = vmatprep.subr.mxu0 0.0
        %1125 = vmatpush1.msra.mxu0 0.0
        %1126 = vmatprep.subr.mxu0 0.0
        %1127 = vmatpush1.msra.mxu0 0.0
        %1128 = vmatprep.mubr.f32.mxu0 0.0
        %1129 = vmatmul.mubr.f32.gmra.mrb[0].mxu0 %v985
        %v1130 = vpop.f32.mrb[0].mxu0
        %v1131 = vadd.f32 0.0, %v1130
        %v1132 = vpop.f32.mrb[0].mxu0
        %1133 = vdwg.mxu0
        %v1134 = vadd.f32 %v965, %v1060
        %v1135 = vadd.f32 %v966, %v1062
        %v1136 = vadd.f32 %v967, %v1131
        %v1137 = vld [vmem:[%s141] sm:$0xff]
        %v1138 = vld [vmem:[%s141 + $0x8] sm:$0xf]
        %s1139 = scalar_lea.vmem %s1, 48
        %v1140 = vld [vmem:[%s1139] sm:$0xff]
        %v1143 = vcombine.high %v1137, %v1137
        %1144 = vrot.lane.b32.xlu0 %v1137, 92
        %v1145 = vpop.permute.xlu0 %1144
        %1146 = vrot.lane.b32.xlu0 %v1143, 92
        %v1147 = vpop.permute.xlu0 %1146
        %1148 = vrot.lane.b32.xlu0 %v1138, 92
        %v1149 = vpop.permute.xlu0 %1148
        %vm1150 = vcmask 752640
        %v1151 = vsel %vm1150, %v1145, %v1147
        %v1152 = vsel %vm1150, %v1147, %v1149
        %v1154 = vsel %vm159, %v1140, 0
        %v1156 = vsel %vm163, %v1151, 0
        %v1158 = vsel %vm163, %v1152, 0
        %v1160 = vsel %vm163, %v1149, 0
        %1162 = vmatprep.subr.mxu0 %v1158
        %1163 = vmatpush1.msra.mxu0 %v1156
        %1164 = vmatprep.subr.mxu0 0.0
        %1165 = vmatpush1.msra.mxu0 0.0
        %1166 = vmatprep.subr.mxu0 0.0
        %1167 = vmatpush1.msra.mxu0 0.0
        %1168 = vmatprep.subr.mxu0 0.0
        %1169 = vmatpush1.msra.mxu0 0.0
        %1170 = vmatprep.subr.mxu0 0.0
        %1171 = vmatpush1.msra.mxu0 0.0
        %1172 = vmatprep.subr.mxu0 0.0
        %1173 = vmatpush1.msra.mxu0 0.0
        %1174 = vmatprep.subr.mxu0 0.0
        %1175 = vmatpush1.msra.mxu0 0.0
        %1176 = vmatprep.subr.mxu0 0.0
        %1177 = vmatpush1.msra.mxu0 0.0
        %1178 = vmatprep.subr.mxu0 0.0
        %1179 = vmatpush1.msra.mxu0 0.0
        %1180 = vmatprep.subr.mxu0 0.0
        %1181 = vmatpush1.msra.mxu0 0.0
        %1182 = vmatprep.subr.mxu0 0.0
        %1183 = vmatpush1.msra.mxu0 0.0
        %1184 = vmatprep.subr.mxu0 0.0
        %1185 = vmatpush1.msra.mxu0 0.0
        %1186 = vmatprep.subr.mxu0 0.0
        %1187 = vmatpush1.msra.mxu0 0.0
        %1188 = vmatprep.subr.mxu0 0.0
        %1189 = vmatpush1.msra.mxu0 0.0
        %1190 = vmatprep.subr.mxu0 0.0
        %1191 = vmatpush1.msra.mxu0 0.0
        %1192 = vmatprep.subr.mxu0 0.0
        %1193 = vmatpush1.msra.mxu0 0.0
        %1194 = vmatprep.subr.mxu0 0.0
        %1195 = vmatpush1.msra.mxu0 0.0
        %1196 = vmatprep.subr.mxu0 0.0
        %1197 = vmatpush1.msra.mxu0 0.0
        %1198 = vmatprep.subr.mxu0 0.0
        %1199 = vmatpush1.msra.mxu0 0.0
        %1200 = vmatprep.subr.mxu0 0.0
        %1201 = vmatpush1.msra.mxu0 0.0
        %1202 = vmatprep.subr.mxu0 0.0
        %1203 = vmatpush1.msra.mxu0 0.0
        %1204 = vmatprep.subr.mxu0 0.0
        %1205 = vmatpush1.msra.mxu0 0.0
        %1206 = vmatprep.subr.mxu0 0.0
        %1207 = vmatpush1.msra.mxu0 0.0
        %1208 = vmatprep.subr.mxu0 0.0
        %1209 = vmatpush1.msra.mxu0 0.0
        %1210 = vmatprep.subr.mxu0 0.0
        %1211 = vmatpush1.msra.mxu0 0.0
        %1212 = vmatprep.subr.mxu0 0.0
        %1213 = vmatpush1.msra.mxu0 0.0
        %1214 = vmatprep.subr.mxu0 0.0
        %1215 = vmatpush1.msra.mxu0 0.0
        %1216 = vmatprep.subr.mxu0 0.0
        %1217 = vmatpush1.msra.mxu0 0.0
        %1218 = vmatprep.subr.mxu0 0.0
        %1219 = vmatpush1.msra.mxu0 0.0
        %1220 = vmatprep.subr.mxu0 0.0
        %1221 = vmatpush1.msra.mxu0 0.0
        %1222 = vmatprep.subr.mxu0 0.0
        %1223 = vmatpush1.msra.mxu0 0.0
        %1224 = vmatprep.subr.mxu0 0.0
        %1225 = vmatpush1.msra.mxu0 0.0
        %1226 = vmatprep.mubr.f32.mxu0 0.0
        %1227 = vmatmul.mubr.f32.gmra.mrb[0].mxu0 %v1154
        %v1228 = vpop.f32.mrb[0].mxu0
        %v1229 = vadd.f32 0.0, %v1228
        %v1230 = vpop.f32.mrb[0].mxu0
        %v1231 = vadd.f32 0.0, %v1230
        %1232 = vdwg.mxu0
        %1233 = vmatprep.subr.mxu0 0.0
        %1234 = vmatpush1.msra.mxu0 %v1160
        %1235 = vmatprep.subr.mxu0 0.0
        %1236 = vmatpush1.msra.mxu0 0.0
        %1237 = vmatprep.subr.mxu0 0.0
        %1238 = vmatpush1.msra.mxu0 0.0
        %1239 = vmatprep.subr.mxu0 0.0
        %1240 = vmatpush1.msra.mxu0 0.0
        %1241 = vmatprep.subr.mxu0 0.0
        %1242 = vmatpush1.msra.mxu0 0.0
        %1243 = vmatprep.subr.mxu0 0.0
        %1244 = vmatpush1.msra.mxu0 0.0
        %1245 = vmatprep.subr.mxu0 0.0
        %1246 = vmatpush1.msra.mxu0 0.0
        %1247 = vmatprep.subr.mxu0 0.0
        %1248 = vmatpush1.msra.mxu0 0.0
        %1249 = vmatprep.subr.mxu0 0.0
        %1250 = vmatpush1.msra.mxu0 0.0
        %1251 = vmatprep.subr.mxu0 0.0
        %1252 = vmatpush1.msra.mxu0 0.0
        %1253 = vmatprep.subr.mxu0 0.0
        %1254 = vmatpush1.msra.mxu0 0.0
        %1255 = vmatprep.subr.mxu0 0.0
        %1256 = vmatpush1.msra.mxu0 0.0
        %1257 = vmatprep.subr.mxu0 0.0
        %1258 = vmatpush1.msra.mxu0 0.0
        %1259 = vmatprep.subr.mxu0 0.0
        %1260 = vmatpush1.msra.mxu0 0.0
        %1261 = vmatprep.subr.mxu0 0.0
        %1262 = vmatpush1.msra.mxu0 0.0
        %1263 = vmatprep.subr.mxu0 0.0
        %1264 = vmatpush1.msra.mxu0 0.0
        %1265 = vmatprep.subr.mxu0 0.0
        %1266 = vmatpush1.msra.mxu0 0.0
        %1267 = vmatprep.subr.mxu0 0.0
        %1268 = vmatpush1.msra.mxu0 0.0
        %1269 = vmatprep.subr.mxu0 0.0
        %1270 = vmatpush1.msra.mxu0 0.0
        %1271 = vmatprep.subr.mxu0 0.0
        %1272 = vmatpush1.msra.mxu0 0.0
        %1273 = vmatprep.subr.mxu0 0.0
        %1274 = vmatpush1.msra.mxu0 0.0
        %1275 = vmatprep.subr.mxu0 0.0
        %1276 = vmatpush1.msra.mxu0 0.0
        %1277 = vmatprep.subr.mxu0 0.0
        %1278 = vmatpush1.msra.mxu0 0.0
        %1279 = vmatprep.subr.mxu0 0.0
        %1280 = vmatpush1.msra.mxu0 0.0
        %1281 = vmatprep.subr.mxu0 0.0
        %1282 = vmatpush1.msra.mxu0 0.0
        %1283 = vmatprep.subr.mxu0 0.0
        %1284 = vmatpush1.msra.mxu0 0.0
        %1285 = vmatprep.subr.mxu0 0.0
        %1286 = vmatpush1.msra.mxu0 0.0
        %1287 = vmatprep.subr.mxu0 0.0
        %1288 = vmatpush1.msra.mxu0 0.0
        %1289 = vmatprep.subr.mxu0 0.0
        %1290 = vmatpush1.msra.mxu0 0.0
        %1291 = vmatprep.subr.mxu0 0.0
        %1292 = vmatpush1.msra.mxu0 0.0
        %1293 = vmatprep.subr.mxu0 0.0
        %1294 = vmatpush1.msra.mxu0 0.0
        %1295 = vmatprep.subr.mxu0 0.0
        %1296 = vmatpush1.msra.mxu0 0.0
        %1297 = vmatprep.mubr.f32.mxu0 0.0
        %1298 = vmatmul.mubr.f32.gmra.mrb[0].mxu0 %v1154
        %v1299 = vpop.f32.mrb[0].mxu0
        %v1300 = vadd.f32 0.0, %v1299
        %v1301 = vpop.f32.mrb[0].mxu0
        %1302 = vdwg.mxu0
        %v1303 = vadd.f32 %v1134, %v1229
        %v1304 = vadd.f32 %v1135, %v1231
        %v1305 = vadd.f32 %v1136, %v1300
        %v1306 = vld [vmem:[%s141] sm:$0xff]
        %v1307 = vld [vmem:[%s141 + $0x8] sm:$0xf]
        %s1308 = scalar_lea.vmem %s1, 56
        %v1309 = vld [vmem:[%s1308] sm:$0xff]
        %v1312 = vcombine.high %v1306, %v1306
        %1313 = vrot.lane.b32.xlu0 %v1306, 91
        %v1314 = vpop.permute.xlu0 %1313
        %1315 = vrot.lane.b32.xlu0 %v1312, 91
        %v1316 = vpop.permute.xlu0 %1315
        %1317 = vrot.lane.b32.xlu0 %v1307, 91
        %v1318 = vpop.permute.xlu0 %1317
        %vm1319 = vcmask 744448
        %v1320 = vsel %vm1319, %v1314, %v1316
        %v1321 = vsel %vm1319, %v1316, %v1318
        %v1323 = vsel %vm159, %v1309, 0
        %v1325 = vsel %vm163, %v1320, 0
        %v1327 = vsel %vm163, %v1321, 0
        %v1329 = vsel %vm163, %v1318, 0
        %1331 = vmatprep.subr.mxu0 %v1327
        %1332 = vmatpush1.msra.mxu0 %v1325
        %1333 = vmatprep.subr.mxu0 0.0
        %1334 = vmatpush1.msra.mxu0 0.0
        %1335 = vmatprep.subr.mxu0 0.0
        %1336 = vmatpush1.msra.mxu0 0.0
        %1337 = vmatprep.subr.mxu0 0.0
        %1338 = vmatpush1.msra.mxu0 0.0
        %1339 = vmatprep.subr.mxu0 0.0
        %1340 = vmatpush1.msra.mxu0 0.0
        %1341 = vmatprep.subr.mxu0 0.0
        %1342 = vmatpush1.msra.mxu0 0.0
        %1343 = vmatprep.subr.mxu0 0.0
        %1344 = vmatpush1.msra.mxu0 0.0
        %1345 = vmatprep.subr.mxu0 0.0
        %1346 = vmatpush1.msra.mxu0 0.0
        %1347 = vmatprep.subr.mxu0 0.0
        %1348 = vmatpush1.msra.mxu0 0.0
        %1349 = vmatprep.subr.mxu0 0.0
        %1350 = vmatpush1.msra.mxu0 0.0
        %1351 = vmatprep.subr.mxu0 0.0
        %1352 = vmatpush1.msra.mxu0 0.0
        %1353 = vmatprep.subr.mxu0 0.0
        %1354 = vmatpush1.msra.mxu0 0.0
        %1355 = vmatprep.subr.mxu0 0.0
        %1356 = vmatpush1.msra.mxu0 0.0
        %1357 = vmatprep.subr.mxu0 0.0
        %1358 = vmatpush1.msra.mxu0 0.0
        %1359 = vmatprep.subr.mxu0 0.0
        %1360 = vmatpush1.msra.mxu0 0.0
        %1361 = vmatprep.subr.mxu0 0.0
        %1362 = vmatpush1.msra.mxu0 0.0
        %1363 = vmatprep.subr.mxu0 0.0
        %1364 = vmatpush1.msra.mxu0 0.0
        %1365 = vmatprep.subr.mxu0 0.0
        %1366 = vmatpush1.msra.mxu0 0.0
        %1367 = vmatprep.subr.mxu0 0.0
        %1368 = vmatpush1.msra.mxu0 0.0
        %1369 = vmatprep.subr.mxu0 0.0
        %1370 = vmatpush1.msra.mxu0 0.0
        %1371 = vmatprep.subr.mxu0 0.0
        %1372 = vmatpush1.msra.mxu0 0.0
        %1373 = vmatprep.subr.mxu0 0.0
        %1374 = vmatpush1.msra.mxu0 0.0
        %1375 = vmatprep.subr.mxu0 0.0
        %1376 = vmatpush1.msra.mxu0 0.0
        %1377 = vmatprep.subr.mxu0 0.0
        %1378 = vmatpush1.msra.mxu0 0.0
        %1379 = vmatprep.subr.mxu0 0.0
        %1380 = vmatpush1.msra.mxu0 0.0
        %1381 = vmatprep.subr.mxu0 0.0
        %1382 = vmatpush1.msra.mxu0 0.0
        %1383 = vmatprep.subr.mxu0 0.0
        %1384 = vmatpush1.msra.mxu0 0.0
        %1385 = vmatprep.subr.mxu0 0.0
        %1386 = vmatpush1.msra.mxu0 0.0
        %1387 = vmatprep.subr.mxu0 0.0
        %1388 = vmatpush1.msra.mxu0 0.0
        %1389 = vmatprep.subr.mxu0 0.0
        %1390 = vmatpush1.msra.mxu0 0.0
        %1391 = vmatprep.subr.mxu0 0.0
        %1392 = vmatpush1.msra.mxu0 0.0
        %1393 = vmatprep.subr.mxu0 0.0
        %1394 = vmatpush1.msra.mxu0 0.0
        %1395 = vmatprep.mubr.f32.mxu0 0.0
        %1396 = vmatmul.mubr.f32.gmra.mrb[0].mxu0 %v1323
        %v1397 = vpop.f32.mrb[0].mxu0
        %v1398 = vadd.f32 0.0, %v1397
        %v1399 = vpop.f32.mrb[0].mxu0
        %v1400 = vadd.f32 0.0, %v1399
        %1401 = vdwg.mxu0
        %1402 = vmatprep.subr.mxu0 0.0
        %1403 = vmatpush1.msra.mxu0 %v1329
        %1404 = vmatprep.subr.mxu0 0.0
        %1405 = vmatpush1.msra.mxu0 0.0
        %1406 = vmatprep.subr.mxu0 0.0
        %1407 = vmatpush1.msra.mxu0 0.0
        %1408 = vmatprep.subr.mxu0 0.0
        %1409 = vmatpush1.msra.mxu0 0.0
        %1410 = vmatprep.subr.mxu0 0.0
        %1411 = vmatpush1.msra.mxu0 0.0
        %1412 = vmatprep.subr.mxu0 0.0
        %1413 = vmatpush1.msra.mxu0 0.0
        %1414 = vmatprep.subr.mxu0 0.0
        %1415 = vmatpush1.msra.mxu0 0.0
        %1416 = vmatprep.subr.mxu0 0.0
        %1417 = vmatpush1.msra.mxu0 0.0
        %1418 = vmatprep.subr.mxu0 0.0
        %1419 = vmatpush1.msra.mxu0 0.0
        %1420 = vmatprep.subr.mxu0 0.0
        %1421 = vmatpush1.msra.mxu0 0.0
        %1422 = vmatprep.subr.mxu0 0.0
        %1423 = vmatpush1.msra.mxu0 0.0
        %1424 = vmatprep.subr.mxu0 0.0
        %1425 = vmatpush1.msra.mxu0 0.0
        %1426 = vmatprep.subr.mxu0 0.0
        %1427 = vmatpush1.msra.mxu0 0.0
        %1428 = vmatprep.subr.mxu0 0.0
        %1429 = vmatpush1.msra.mxu0 0.0
        %1430 = vmatprep.subr.mxu0 0.0
        %1431 = vmatpush1.msra.mxu0 0.0
        %1432 = vmatprep.subr.mxu0 0.0
        %1433 = vmatpush1.msra.mxu0 0.0
        %1434 = vmatprep.subr.mxu0 0.0
        %1435 = vmatpush1.msra.mxu0 0.0
        %1436 = vmatprep.subr.mxu0 0.0
        %1437 = vmatpush1.msra.mxu0 0.0
        %1438 = vmatprep.subr.mxu0 0.0
        %1439 = vmatpush1.msra.mxu0 0.0
        %1440 = vmatprep.subr.mxu0 0.0
        %1441 = vmatpush1.msra.mxu0 0.0
        %1442 = vmatprep.subr.mxu0 0.0
        %1443 = vmatpush1.msra.mxu0 0.0
        %1444 = vmatprep.subr.mxu0 0.0
        %1445 = vmatpush1.msra.mxu0 0.0
        %1446 = vmatprep.subr.mxu0 0.0
        %1447 = vmatpush1.msra.mxu0 0.0
        %1448 = vmatprep.subr.mxu0 0.0
        %1449 = vmatpush1.msra.mxu0 0.0
        %1450 = vmatprep.subr.mxu0 0.0
        %1451 = vmatpush1.msra.mxu0 0.0
        %1452 = vmatprep.subr.mxu0 0.0
        %1453 = vmatpush1.msra.mxu0 0.0
        %1454 = vmatprep.subr.mxu0 0.0
        %1455 = vmatpush1.msra.mxu0 0.0
        %1456 = vmatprep.subr.mxu0 0.0
        %1457 = vmatpush1.msra.mxu0 0.0
        %1458 = vmatprep.subr.mxu0 0.0
        %1459 = vmatpush1.msra.mxu0 0.0
        %1460 = vmatprep.subr.mxu0 0.0
        %1461 = vmatpush1.msra.mxu0 0.0
        %1462 = vmatprep.subr.mxu0 0.0
        %1463 = vmatpush1.msra.mxu0 0.0
        %1464 = vmatprep.subr.mxu0 0.0
        %1465 = vmatpush1.msra.mxu0 0.0
        %1466 = vmatprep.mubr.f32.mxu0 0.0
        %1467 = vmatmul.mubr.f32.gmra.mrb[0].mxu0 %v1323
        %v1468 = vpop.f32.mrb[0].mxu0
        %v1469 = vadd.f32 0.0, %v1468
        %v1470 = vpop.f32.mrb[0].mxu0
        %1471 = vdwg.mxu0
        %v1472 = vadd.f32 %v1303, %v1398
        %v1473 = vadd.f32 %v1304, %v1400
        %v1474 = vadd.f32 %v1305, %v1469
        %v1475 = vld [vmem:[%s141] sm:$0xff]
        %v1476 = vld [vmem:[%s141 + $0x8] sm:$0xf]
        %s1477 = scalar_lea.vmem %s1, 64
        %v1478 = vld [vmem:[%s1477] sm:$0xff]
        %v1481 = vcombine.high %v1475, %v1475
        %1482 = vrot.lane.b32.xlu0 %v1475, 90
        %v1483 = vpop.permute.xlu0 %1482
        %1484 = vrot.lane.b32.xlu0 %v1481, 90
        %v1485 = vpop.permute.xlu0 %1484
        %1486 = vrot.lane.b32.xlu0 %v1476, 90
        %v1487 = vpop.permute.xlu0 %1486
        %vm1488 = vcmask 736256
        %v1489 = vsel %vm1488, %v1483, %v1485
        %v1490 = vsel %vm1488, %v1485, %v1487
        %v1492 = vsel %vm159, %v1478, 0
        %v1494 = vsel %vm163, %v1489, 0
        %v1496 = vsel %vm163, %v1490, 0
        %v1498 = vsel %vm163, %v1487, 0
        %1500 = vmatprep.subr.mxu0 %v1496
        %1501 = vmatpush1.msra.mxu0 %v1494
        %1502 = vmatprep.subr.mxu0 0.0
        %1503 = vmatpush1.msra.mxu0 0.0
        %1504 = vmatprep.subr.mxu0 0.0
        %1505 = vmatpush1.msra.mxu0 0.0
        %1506 = vmatprep.subr.mxu0 0.0
        %1507 = vmatpush1.msra.mxu0 0.0
        %1508 = vmatprep.subr.mxu0 0.0
        %1509 = vmatpush1.msra.mxu0 0.0
        %1510 = vmatprep.subr.mxu0 0.0
        %1511 = vmatpush1.msra.mxu0 0.0
        %1512 = vmatprep.subr.mxu0 0.0
        %1513 = vmatpush1.msra.mxu0 0.0
        %1514 = vmatprep.subr.mxu0 0.0
        %1515 = vmatpush1.msra.mxu0 0.0
        %1516 = vmatprep.subr.mxu0 0.0
        %1517 = vmatpush1.msra.mxu0 0.0
        %1518 = vmatprep.subr.mxu0 0.0
        %1519 = vmatpush1.msra.mxu0 0.0
        %1520 = vmatprep.subr.mxu0 0.0
        %1521 = vmatpush1.msra.mxu0 0.0
        %1522 = vmatprep.subr.mxu0 0.0
        %1523 = vmatpush1.msra.mxu0 0.0
        %1524 = vmatprep.subr.mxu0 0.0
        %1525 = vmatpush1.msra.mxu0 0.0
        %1526 = vmatprep.subr.mxu0 0.0
        %1527 = vmatpush1.msra.mxu0 0.0
        %1528 = vmatprep.subr.mxu0 0.0
        %1529 = vmatpush1.msra.mxu0 0.0
        %1530 = vmatprep.subr.mxu0 0.0
        %1531 = vmatpush1.msra.mxu0 0.0
        %1532 = vmatprep.subr.mxu0 0.0
        %1533 = vmatpush1.msra.mxu0 0.0
        %1534 = vmatprep.subr.mxu0 0.0
        %1535 = vmatpush1.msra.mxu0 0.0
        %1536 = vmatprep.subr.mxu0 0.0
        %1537 = vmatpush1.msra.mxu0 0.0
        %1538 = vmatprep.subr.mxu0 0.0
        %1539 = vmatpush1.msra.mxu0 0.0
        %1540 = vmatprep.subr.mxu0 0.0
        %1541 = vmatpush1.msra.mxu0 0.0
        %1542 = vmatprep.subr.mxu0 0.0
        %1543 = vmatpush1.msra.mxu0 0.0
        %1544 = vmatprep.subr.mxu0 0.0
        %1545 = vmatpush1.msra.mxu0 0.0
        %1546 = vmatprep.subr.mxu0 0.0
        %1547 = vmatpush1.msra.mxu0 0.0
        %1548 = vmatprep.subr.mxu0 0.0
        %1549 = vmatpush1.msra.mxu0 0.0
        %1550 = vmatprep.subr.mxu0 0.0
        %1551 = vmatpush1.msra.mxu0 0.0
        %1552 = vmatprep.subr.mxu0 0.0
        %1553 = vmatpush1.msra.mxu0 0.0
        %1554 = vmatprep.subr.mxu0 0.0
        %1555 = vmatpush1.msra.mxu0 0.0
        %1556 = vmatprep.subr.mxu0 0.0
        %1557 = vmatpush1.msra.mxu0 0.0
        %1558 = vmatprep.subr.mxu0 0.0
        %1559 = vmatpush1.msra.mxu0 0.0
        %1560 = vmatprep.subr.mxu0 0.0
        %1561 = vmatpush1.msra.mxu0 0.0
        %1562 = vmatprep.subr.mxu0 0.0
        %1563 = vmatpush1.msra.mxu0 0.0
        %1564 = vmatprep.mubr.f32.mxu0 0.0
        %1565 = vmatmul.mubr.f32.gmra.mrb[0].mxu0 %v1492
        %v1566 = vpop.f32.mrb[0].mxu0
        %v1567 = vadd.f32 0.0, %v1566
        %v1568 = vpop.f32.mrb[0].mxu0
        %v1569 = vadd.f32 0.0, %v1568
        %1570 = vdwg.mxu0
        %1571 = vmatprep.subr.mxu0 0.0
        %1572 = vmatpush1.msra.mxu0 %v1498
        %1573 = vmatprep.subr.mxu0 0.0
        %1574 = vmatpush1.msra.mxu0 0.0
        %1575 = vmatprep.subr.mxu0 0.0
        %1576 = vmatpush1.msra.mxu0 0.0
        %1577 = vmatprep.subr.mxu0 0.0
        %1578 = vmatpush1.msra.mxu0 0.0
        %1579 = vmatprep.subr.mxu0 0.0
        %1580 = vmatpush1.msra.mxu0 0.0
        %1581 = vmatprep.subr.mxu0 0.0
        %1582 = vmatpush1.msra.mxu0 0.0
        %1583 = vmatprep.subr.mxu0 0.0
        %1584 = vmatpush1.msra.mxu0 0.0
        %1585 = vmatprep.subr.mxu0 0.0
        %1586 = vmatpush1.msra.mxu0 0.0
        %1587 = vmatprep.subr.mxu0 0.0
        %1588 = vmatpush1.msra.mxu0 0.0
        %1589 = vmatprep.subr.mxu0 0.0
        %1590 = vmatpush1.msra.mxu0 0.0
        %1591 = vmatprep.subr.mxu0 0.0
        %1592 = vmatpush1.msra.mxu0 0.0
        %1593 = vmatprep.subr.mxu0 0.0
        %1594 = vmatpush1.msra.mxu0 0.0
        %1595 = vmatprep.subr.mxu0 0.0
        %1596 = vmatpush1.msra.mxu0 0.0
        %1597 = vmatprep.subr.mxu0 0.0
        %1598 = vmatpush1.msra.mxu0 0.0
        %1599 = vmatprep.subr.mxu0 0.0
        %1600 = vmatpush1.msra.mxu0 0.0
        %1601 = vmatprep.subr.mxu0 0.0
        %1602 = vmatpush1.msra.mxu0 0.0
        %1603 = vmatprep.subr.mxu0 0.0
        %1604 = vmatpush1.msra.mxu0 0.0
        %1605 = vmatprep.subr.mxu0 0.0
        %1606 = vmatpush1.msra.mxu0 0.0
        %1607 = vmatprep.subr.mxu0 0.0
        %1608 = vmatpush1.msra.mxu0 0.0
        %1609 = vmatprep.subr.mxu0 0.0
        %1610 = vmatpush1.msra.mxu0 0.0
        %1611 = vmatprep.subr.mxu0 0.0
        %1612 = vmatpush1.msra.mxu0 0.0
        %1613 = vmatprep.subr.mxu0 0.0
        %1614 = vmatpush1.msra.mxu0 0.0
        %1615 = vmatprep.subr.mxu0 0.0
        %1616 = vmatpush1.msra.mxu0 0.0
        %1617 = vmatprep.subr.mxu0 0.0
        %1618 = vmatpush1.msra.mxu0 0.0
        %1619 = vmatprep.subr.mxu0 0.0
        %1620 = vmatpush1.msra.mxu0 0.0
        %1621 = vmatprep.subr.mxu0 0.0
        %1622 = vmatpush1.msra.mxu0 0.0
        %1623 = vmatprep.subr.mxu0 0.0
        %1624 = vmatpush1.msra.mxu0 0.0
        %1625 = vmatprep.subr.mxu0 0.0
        %1626 = vmatpush1.msra.mxu0 0.0
        %1627 = vmatprep.subr.mxu0 0.0
        %1628 = vmatpush1.msra.mxu0 0.0
        %1629 = vmatprep.subr.mxu0 0.0
        %1630 = vmatpush1.msra.mxu0 0.0
        %1631 = vmatprep.subr.mxu0 0.0
        %1632 = vmatpush1.msra.mxu0 0.0
        %1633 = vmatprep.subr.mxu0 0.0
        %1634 = vmatpush1.msra.mxu0 0.0
        %1635 = vmatprep.mubr.f32.mxu0 0.0
        %1636 = vmatmul.mubr.f32.gmra.mrb[0].mxu0 %v1492
        %v1637 = vpop.f32.mrb[0].mxu0
        %v1638 = vadd.f32 0.0, %v1637
        %v1639 = vpop.f32.mrb[0].mxu0
        %1640 = vdwg.mxu0
        %v1641 = vadd.f32 %v1472, %v1567
        %v1642 = vadd.f32 %v1473, %v1569
        %v1643 = vadd.f32 %v1474, %v1638
        %1644 = vst [vmem:[%s136] sm:$0xff] %v1641
        %1645 = vst [vmem:[%s136 + $0x8] sm:$0xff] %v1642
        %vm1646 = vcmask 261120
        %1647 = vst.msk [vmem:[%s136 + $0x10] sm:$0xff] %vm1646, %v1643
        %s1648 = sand.u32 %s71, 1
        %s1649 = scalar_lea.sflag [#allocation3], %s1648
        %s1650 = sand.u32 %s71, 1
        %s1651 = smul.addr %s1650, 24
        %s1652 = scalar_lea.vmem [#allocation2], %s1651
        // Predicated region
        $region29: #{tpu_custom_call.1} parent=27 // pred_check
          %p1653 = pneg %p81
        $region30: #{tpu_custom_call.1} parent=27 // pred_check_branch
          %1655 = sbr.rel (%p1653) target = $region32
        $region31: #{tpu_custom_call.1} parent=27 // pred_region
          %s1657 = ssub.s32 384, 384
          %1658 = vsyncadd %s1649, %s1657
          %s1659 = smul.addr %s16, 3
          %s1660 = smul.addr %s1659, 128
          %s1661 = scalar_lea.hbm %s2, %s1660
          %s1663 = sshll.u32 %s1652, 4
          %s1664 = int_to_ptr.vmem [resolvable:$true] %s1663
          %1666 = dma.vmem_to_hbm [thread:$0]  %s1664, 384, %s1661, %s1649
        $region32: #{tpu_custom_call.1} parent=27 // pred_fallthru
          _
      $region28: #{tpu_custom_call.1} parent=5 // pred_fallthru
        _
      %p1667 = scmp.le.s32.totalorder 2, %s11
      // Predicated region
      $region33: #{tpu_custom_call.1} parent=5 // pred_check
        %p1668 = pneg %p1667
      $region34: #{tpu_custom_call.1} parent=5 // pred_check_branch
        %1670 = sbr.rel (%p1668) target = $region36
      $region35: #{tpu_custom_call.1} parent=5 // pred_region
        %s1671 = ssub.s32 %s11, 2
        // Predicated region
        $region37: #{tpu_custom_call.1} parent=35 // pred_check
          %p1672 = pneg %p87
        $region38: #{tpu_custom_call.1} parent=35 // pred_check_branch
          %1674 = sbr.rel (%p1672) target = $region40
        $region39: #{tpu_custom_call.1} parent=35 // pred_region
          %s1675 = sand.u32 %s72, 1
          %s1676 = scalar_lea.sflag [#allocation3], %s1675
          %s1677 = sand.u32 %s72, 1
          %s1678 = smul.addr %s1677, 24
          %s1679 = scalar_lea.vmem [#allocation2], %s1678
          %1680 = dma.done %s1676, 384
        $region40: #{tpu_custom_call.1} parent=35 // pred_fallthru
          _
      $region36: #{tpu_custom_call.1} parent=5 // pred_fallthru
        _
    $region6: #{tpu_custom_call.1} parent=1 // loop_footer
      %s15 = sadd.s32 1, %s11
    $region7: #{tpu_custom_call.1} parent=1 // loop_footer_branch
      %10 = sbr.rel target = $region3
    $region8: #{tpu_custom_call.1} parent=1 // loop_exit
      _
    %1681 = vsyncpa [#allocation3], 1
    %s1682 = scalar_lea.sflag [#allocation3], 1
    %1683 = vsyncpa %s1682, 1

</llo_original>
